<compile_context>
chip_gen: v7x
topology: tpu7x:2x2x1
jax: 0.10.0
libtpu: 0.0.40
codegen_flags: <defaults>
</compile_context>

<pallas_src>
import jax
import jax.numpy as jnp
from jax import lax
from jax.experimental import pallas as pl
from jax.experimental.pallas import tpu as pltpu

EMBED = 64                  # embed_len from the reference script
NUM_HEADS = 4
HEAD = EMBED // NUM_HEADS
SCALE = 1.0 / float(HEAD) ** 0.5   # ScaledDotProduct is built with dk = head_length
LN_EPS = 1e-5               # PyTorch nn.LayerNorm default eps


# ---------------------------------------------------------------------------
# fused decoder-block kernel: one grid step per batch element
# ---------------------------------------------------------------------------
def decoder_block_kernel(tgt_ref, enc_ref, wqkv_ref, bqkv_ref, wo_ref, bo_ref,
                         ln_ref, out_ref):
    # tgt_ref:  (S, E)      target rows for this batch element
    # enc_ref:  (Sk, E)     encoder rows for this batch element
    # wqkv_ref: (2, E, 3E)  fused [Wq|Wk|Wv] for [self-attn, cross-attn]
    # bqkv_ref: (2, 3E)     fused [bq|bk|bv]
    # wo_ref:   (2, E, E)   output projections
    # bo_ref:   (2, E)      output-projection biases
    # ln_ref:   (6, E)      [g1, b1, g2, b2, g3, b3]
    x = tgt_ref[...]
    enc = enc_ref[...]

    def project_qkv(v, idx):
        # single (rows, 64) @ (64, 192) MXU matmul + bias
        return (jnp.dot(v, wqkv_ref[idx], preferred_element_type=jnp.float32)
                + bqkv_ref[idx:idx + 1, :])

    def mha(qkv_q, qkv_kv, idx):
        # per-head attention on lane slices of the fused projection
        ctx_parts = []
        for h in range(NUM_HEADS):
            lo = h * HEAD
            q_h = qkv_q[:, lo:lo + HEAD]
            k_h = qkv_kv[:, EMBED + lo:EMBED + lo + HEAD]
            v_h = qkv_kv[:, 2 * EMBED + lo:2 * EMBED + lo + HEAD]
            # contract last dims directly (no materialized k.T)
            s = lax.dot_general(q_h, k_h, (((1,), (1,)), ((), ())),
                                preferred_element_type=jnp.float32) * SCALE
            s = s - jnp.max(s, axis=-1, keepdims=True)
            p = jnp.exp(s)
            p = p / jnp.sum(p, axis=-1, keepdims=True)      # exact softmax denom
            ctx_parts.append(jnp.dot(p, v_h, preferred_element_type=jnp.float32))
        # lane-concatenate the heads and do ONE output projection (K = 64)
        ctx = jnp.concatenate(ctx_parts, axis=-1)
        return (jnp.dot(ctx, wo_ref[idx], preferred_element_type=jnp.float32)
                + bo_ref[idx:idx + 1, :])

    def layernorm(v, idx):
        gamma = ln_ref[2 * idx:2 * idx + 1, :]
        beta = ln_ref[2 * idx + 1:2 * idx + 2, :]
        mu = jnp.mean(v, axis=-1, keepdims=True)
        vc = v - mu
        var = jnp.mean(vc * vc, axis=-1, keepdims=True)
        return vc * lax.rsqrt(var + LN_EPS) * gamma + beta

    # --- masked self-attention sublayer (module is built with mask=None) ---
    qkv_self = project_qkv(x, 0)
    sa = mha(qkv_self, qkv_self, 0)
    y1 = layernorm(sa + x, 0)                    # dropout = identity (eval)

    # --- encoder-decoder attention sublayer ---
    qkv_q2 = project_qkv(y1, 1)
    qkv_kv2 = project_qkv(enc, 1)
    ca = mha(qkv_q2, qkv_kv2, 1)
    y2 = layernorm(ca + y1, 1)

    # --- feed-forward sublayer ---
    # TODO(synk): the feed_forward is a strawberryfields/PennyLane quantum qnode
    # (qml.qnn.TorchLayer); it has no Pallas equivalent and is treated as identity.
    ff = y2
    out_ref[...] = layernorm(ff + y2, 2)


# ---------------------------------------------------------------------------
# one-time parameter packing (NOT in the per-call path)
# ---------------------------------------------------------------------------
def pack_params(params):
    (wq1, bq1, wk1, bk1, wv1, bv1, wo1, bo1,
     wq2, bq2, wk2, bk2, wv2, bv2, wo2, bo2,
     g1, be1, g2, be2, g3, be3) = params
    E = wq1.shape[0]
    r = lambda a: jnp.reshape(a, (E,))
    Wqkv = jnp.stack([jnp.concatenate([wq1, wk1, wv1], axis=1),
                      jnp.concatenate([wq2, wk2, wv2], axis=1)], axis=0)       # (2,E,3E)
    Bqkv = jnp.stack([jnp.concatenate([r(bq1), r(bk1), r(bv1)]),
                      jnp.concatenate([r(bq2), r(bk2), r(bv2)])], axis=0)      # (2,3E)
    Wo = jnp.stack([wo1, wo2], axis=0)                                         # (2,E,E)
    Bo = jnp.stack([r(bo1), r(bo2)], axis=0)                                   # (2,E)
    LN = jnp.stack([r(g1), r(be1), r(g2), r(be2), r(g3), r(be3)], axis=0)      # (6,E)
    return Wqkv, Bqkv, Wo, Bo, LN


# ---------------------------------------------------------------------------
# jitted forward: grid over batch, weights resident across grid steps
# ---------------------------------------------------------------------------
@jax.jit
def decoder_block(target, encoder_output, packed):
    B, S, E = target.shape
    _, Sk, _ = encoder_output.shape
    Wqkv, Bqkv, Wo, Bo, LN = packed

    return pl.pallas_call(
        decoder_block_kernel,
        out_shape=jax.ShapeDtypeStruct((B, S, E), jnp.float32),
        grid=(B,),
        in_specs=[
            pl.BlockSpec((None, S, E), lambda b: (b, 0, 0)),      # target rows of batch b
            pl.BlockSpec((None, Sk, E), lambda b: (b, 0, 0)),     # encoder rows of batch b
            pl.BlockSpec((2, E, 3 * E), lambda b: (0, 0, 0)),     # fused QKV weights (resident)
            pl.BlockSpec((2, 3 * E), lambda b: (0, 0)),           # fused QKV biases
            pl.BlockSpec((2, E, E), lambda b: (0, 0, 0)),         # output-proj weights
            pl.BlockSpec((2, E), lambda b: (0, 0)),               # output-proj biases
            pl.BlockSpec((6, E), lambda b: (0, 0)),               # layernorm params
        ],
        out_specs=pl.BlockSpec((None, S, E), lambda b: (b, 0, 0)),
        compiler_params=pltpu.CompilerParams(dimension_semantics=("parallel",)),
    )(target, encoder_output, Wqkv, Bqkv, Wo, Bo, LN)


# ---------------------------------------------------------------------------
# pure-JAX reference (for correctness sanity check)
# ---------------------------------------------------------------------------
def _ref_forward(target, enc, p):
    (wq1, bq1, wk1, bk1, wv1, bv1, wo1, bo1,
     wq2, bq2, wk2, bk2, wv2, bv2, wo2, bo2,
     g1, be1, g2, be2, g3, be3) = p

    def mha(xq, xkv, wq, bq, wk, bk, wv, bv, wo, bo):
        B, S, E = xq.shape
        Sk = xkv.shape[1]
        q = (xq @ wq + bq).reshape(B, S, NUM_HEADS, HEAD).transpose(0, 2, 1, 3)
        k = (xkv @ wk + bk).reshape(B, Sk, NUM_HEADS, HEAD).transpose(0, 2, 1, 3)
        v = (xkv @ wv + bv).reshape(B, Sk, NUM_HEADS, HEAD).transpose(0, 2, 1, 3)
        s = jnp.einsum("bhqd,bhkd->bhqk", q, k) * SCALE
        a = jax.nn.softmax(s, axis=-1)
        o = jnp.einsum("bhqk,bhkd->bhqd", a, v).transpose(0, 2, 1, 3).reshape(B, S, E)
        return o @ wo + bo

    def ln(x, g, b):
        mu = jnp.mean(x, -1, keepdims=True)
        var = jnp.mean((x - mu) ** 2, -1, keepdims=True)
        return (x - mu) * lax.rsqrt(var + LN_EPS) * g + b

    y1 = ln(mha(target, target, wq1, bq1, wk1, bk1, wv1, bv1, wo1, bo1) + target, g1, be1)
    y2 = ln(mha(y1, enc, wq2, bq2, wk2, bk2, wv2, bv2, wo2, bo2) + y1, g2, be2)
    return ln(y2 + y2, g3, be3)   # quantum feed-forward treated as identity


# ---------------------------------------------------------------------------
# deterministic parameter construction + demo
# ---------------------------------------------------------------------------
def _make_params(key, E):
    ks = jax.random.split(key, 16)
    bound = 1.0 / jnp.sqrt(jnp.float32(E))

    def lin(kw, kb):
        w = jax.random.uniform(kw, (E, E), jnp.float32, -bound, bound)
        b = jax.random.uniform(kb, (1, E), jnp.float32, -bound, bound)
        return w, b

    params = []
    for i in range(8):  # q1,k1,v1,o1,q2,k2,v2,o2
        w, b = lin(ks[2 * i], ks[2 * i + 1])
        params += [w, b]
    for _ in range(3):  # layernorm params (fresh-module init: gamma=1, beta=0)
        params += [jnp.ones((1, E), jnp.float32), jnp.zeros((1, E), jnp.float32)]
    return params


if __name__ == "__main__":
    key = jax.random.PRNGKey(0)
    kx, ke, kp = jax.random.split(key, 3)

    B, S, Sk, E = 2, 8, 8, EMBED
    target = jax.random.normal(kx, (B, S, E), jnp.float32)
    encoder_output = jax.random.normal(ke, (B, Sk, E), jnp.float32)
    params = _make_params(kp, E)

    # pack once at init (outside the per-call jitted path)
    packed = jax.block_until_ready(pack_params(params))

    out = decoder_block(target, encoder_output, packed)
    out = jax.block_until_ready(out)

    ref = _ref_forward(target, encoder_output, params)
    err = float(jnp.max(jnp.abs(out - ref)))
    if not (err < 1e-3):   # exact softmax -> typically ~1e-5
        raise AssertionError(f"mismatch vs reference, max abs err = {err}")

    print("KERNEL_OK")
</pallas_src>

<mosaic_0001>
module attributes {stable_mosaic.version = 11 : i64} {
  func.func @decoder_block_kernel(%arg0: i32, %arg1: memref<1x8x64xf32, #tpu.memory_space<vmem>>, %arg2: memref<1x8x64xf32, #tpu.memory_space<vmem>>, %arg3: memref<2x64x192xf32, #tpu.memory_space<vmem>>, %arg4: memref<2x192xf32, #tpu.memory_space<vmem>>, %arg5: memref<2x64x64xf32, #tpu.memory_space<vmem>>, %arg6: memref<2x64xf32, #tpu.memory_space<vmem>>, %arg7: memref<6x64xf32, #tpu.memory_space<vmem>>, %arg8: memref<1x8x64xf32, #tpu.memory_space<vmem>>) attributes {dimension_semantics = [#tpu.dimension_semantics<parallel>], iteration_bounds = array<i64: 2>, scalar_prefetch = 0 : i64, scratch_operands = 0 : i64, tpu.core_type = #tpu.core_type<tc>, window_params = [{transform_indices = @transform_0, window_bounds = array<i64: 1, 8, 64>}, {transform_indices = @transform_1, window_bounds = array<i64: 1, 8, 64>}, {pipeline_mode = #tpu.pipeline_mode<synchronous>, transform_indices = @transform_2, window_bounds = array<i64: 2, 64, 192>}, {pipeline_mode = #tpu.pipeline_mode<synchronous>, transform_indices = @transform_3, window_bounds = array<i64: 2, 192>}, {pipeline_mode = #tpu.pipeline_mode<synchronous>, transform_indices = @transform_4, window_bounds = array<i64: 2, 64, 64>}, {pipeline_mode = #tpu.pipeline_mode<synchronous>, transform_indices = @transform_5, window_bounds = array<i64: 2, 64>}, {pipeline_mode = #tpu.pipeline_mode<synchronous>, transform_indices = @transform_6, window_bounds = array<i64: 6, 64>}, {transform_indices = @transform_7, window_bounds = array<i64: 1, 8, 64>}]} {
    %c0 = arith.constant 0 : index
    %c0_0 = arith.constant 0 : index
    %c0_1 = arith.constant 0 : index
    %0 = vector.load %arg1[%c0, %c0_0, %c0_1] : memref<1x8x64xf32, #tpu.memory_space<vmem>>, vector<1x8x64xf32>
    %1 = vector.shape_cast %0 : vector<1x8x64xf32> to vector<8x64xf32>
    %c0_2 = arith.constant 0 : index
    %c0_3 = arith.constant 0 : index
    %c0_4 = arith.constant 0 : index
    %2 = vector.load %arg2[%c0_2, %c0_3, %c0_4] : memref<1x8x64xf32, #tpu.memory_space<vmem>>, vector<1x8x64xf32>
    %3 = vector.shape_cast %2 : vector<1x8x64xf32> to vector<8x64xf32>
    %c0_5 = arith.constant 0 : index
    %c0_6 = arith.constant 0 : index
    %c0_7 = arith.constant 0 : index
    %4 = vector.load %arg3[%c0_5, %c0_6, %c0_7] : memref<2x64x192xf32, #tpu.memory_space<vmem>>, vector<1x64x192xf32>
    %5 = vector.shape_cast %4 : vector<1x64x192xf32> to vector<64x192xf32>
    %cst = arith.constant dense<0.000000e+00> : vector<8x192xf32>
    %6 = tpu.matmul %1, %5, %cst {dimension_numbers = #tpu.dot_dimension_numbers<[1], [0], [0], [1], [0, 0, 1, 1], [], []>} : vector<8x64xf32>, vector<64x192xf32>, vector<8x192xf32> -> vector<8x192xf32>
    %c0_8 = arith.constant 0 : index
    %c0_9 = arith.constant 0 : index
    %7 = vector.load %arg4[%c0_8, %c0_9] : memref<2x192xf32, #tpu.memory_space<vmem>>, vector<1x192xf32>
    %8 = vector.broadcast %7 : vector<1x192xf32> to vector<8x192xf32>
    %9 = arith.addf %6, %8 : vector<8x192xf32>
    %10 = vector.extract_strided_slice %9 {offsets = [0, 0], sizes = [8, 16], strides = [1, 1]} : vector<8x192xf32> to vector<8x16xf32>
    %11 = vector.extract_strided_slice %9 {offsets = [0, 64], sizes = [8, 16], strides = [1, 1]} : vector<8x192xf32> to vector<8x16xf32>
    %12 = vector.extract_strided_slice %9 {offsets = [0, 128], sizes = [8, 16], strides = [1, 1]} : vector<8x192xf32> to vector<8x16xf32>
    %cst_10 = arith.constant dense<0.000000e+00> : vector<8x8xf32>
    %13 = tpu.matmul %10, %11, %cst_10 {dimension_numbers = #tpu.dot_dimension_numbers<[1], [1], [0], [0], [0, 0, 1, 0], [], []>} : vector<8x16xf32>, vector<8x16xf32>, vector<8x8xf32> -> vector<8x8xf32>
    %cst_11 = arith.constant 2.500000e-01 : f32
    %14 = vector.broadcast %cst_11 : f32 to vector<8x8xf32>
    %15 = arith.mulf %13, %14 : vector<8x8xf32>
    %cst_12 = arith.constant dense<0xFF800000> : vector<8xf32>
    %16 = vector.multi_reduction <maximumf>, %15, %cst_12 [1] : vector<8x8xf32> to vector<8xf32>
    %17 = vector.shape_cast %16 : vector<8xf32> to vector<8x1xf32>
    %18 = vector.broadcast %17 : vector<8x1xf32> to vector<8x8xf32>
    %19 = arith.subf %15, %18 : vector<8x8xf32>
    %20 = math.exp %19 : vector<8x8xf32>
    %cst_13 = arith.constant dense<0.000000e+00> : vector<8xf32>
    %21 = vector.multi_reduction <add>, %20, %cst_13 [1] : vector<8x8xf32> to vector<8xf32>
    %22 = vector.shape_cast %21 : vector<8xf32> to vector<8x1xf32>
    %23 = vector.broadcast %22 : vector<8x1xf32> to vector<8x8xf32>
    %24 = arith.divf %20, %23 : vector<8x8xf32>
    %cst_14 = arith.constant dense<0.000000e+00> : vector<8x16xf32>
    %25 = tpu.matmul %24, %12, %cst_14 {dimension_numbers = #tpu.dot_dimension_numbers<[1], [0], [0], [1], [0, 0, 1, 1], [], []>} : vector<8x8xf32>, vector<8x16xf32>, vector<8x16xf32> -> vector<8x16xf32>
    %26 = vector.extract_strided_slice %9 {offsets = [0, 16], sizes = [8, 16], strides = [1, 1]} : vector<8x192xf32> to vector<8x16xf32>
    %27 = vector.extract_strided_slice %9 {offsets = [0, 80], sizes = [8, 16], strides = [1, 1]} : vector<8x192xf32> to vector<8x16xf32>
    %28 = vector.extract_strided_slice %9 {offsets = [0, 144], sizes = [8, 16], strides = [1, 1]} : vector<8x192xf32> to vector<8x16xf32>
    %cst_15 = arith.constant dense<0.000000e+00> : vector<8x8xf32>
    %29 = tpu.matmul %26, %27, %cst_15 {dimension_numbers = #tpu.dot_dimension_numbers<[1], [1], [0], [0], [0, 0, 1, 0], [], []>} : vector<8x16xf32>, vector<8x16xf32>, vector<8x8xf32> -> vector<8x8xf32>
    %cst_16 = arith.constant 2.500000e-01 : f32
    %30 = vector.broadcast %cst_16 : f32 to vector<8x8xf32>
    %31 = arith.mulf %29, %30 : vector<8x8xf32>
    %cst_17 = arith.constant dense<0xFF800000> : vector<8xf32>
    %32 = vector.multi_reduction <maximumf>, %31, %cst_17 [1] : vector<8x8xf32> to vector<8xf32>
    %33 = vector.shape_cast %32 : vector<8xf32> to vector<8x1xf32>
    %34 = vector.broadcast %33 : vector<8x1xf32> to vector<8x8xf32>
    %35 = arith.subf %31, %34 : vector<8x8xf32>
    %36 = math.exp %35 : vector<8x8xf32>
    %cst_18 = arith.constant dense<0.000000e+00> : vector<8xf32>
    %37 = vector.multi_reduction <add>, %36, %cst_18 [1] : vector<8x8xf32> to vector<8xf32>
    %38 = vector.shape_cast %37 : vector<8xf32> to vector<8x1xf32>
    %39 = vector.broadcast %38 : vector<8x1xf32> to vector<8x8xf32>
    %40 = arith.divf %36, %39 : vector<8x8xf32>
    %cst_19 = arith.constant dense<0.000000e+00> : vector<8x16xf32>
    %41 = tpu.matmul %40, %28, %cst_19 {dimension_numbers = #tpu.dot_dimension_numbers<[1], [0], [0], [1], [0, 0, 1, 1], [], []>} : vector<8x8xf32>, vector<8x16xf32>, vector<8x16xf32> -> vector<8x16xf32>
    %42 = vector.extract_strided_slice %9 {offsets = [0, 32], sizes = [8, 16], strides = [1, 1]} : vector<8x192xf32> to vector<8x16xf32>
    %43 = vector.extract_strided_slice %9 {offsets = [0, 96], sizes = [8, 16], strides = [1, 1]} : vector<8x192xf32> to vector<8x16xf32>
    %44 = vector.extract_strided_slice %9 {offsets = [0, 160], sizes = [8, 16], strides = [1, 1]} : vector<8x192xf32> to vector<8x16xf32>
    %cst_20 = arith.constant dense<0.000000e+00> : vector<8x8xf32>
    %45 = tpu.matmul %42, %43, %cst_20 {dimension_numbers = #tpu.dot_dimension_numbers<[1], [1], [0], [0], [0, 0, 1, 0], [], []>} : vector<8x16xf32>, vector<8x16xf32>, vector<8x8xf32> -> vector<8x8xf32>
    %cst_21 = arith.constant 2.500000e-01 : f32
    %46 = vector.broadcast %cst_21 : f32 to vector<8x8xf32>
    %47 = arith.mulf %45, %46 : vector<8x8xf32>
    %cst_22 = arith.constant dense<0xFF800000> : vector<8xf32>
    %48 = vector.multi_reduction <maximumf>, %47, %cst_22 [1] : vector<8x8xf32> to vector<8xf32>
    %49 = vector.shape_cast %48 : vector<8xf32> to vector<8x1xf32>
    %50 = vector.broadcast %49 : vector<8x1xf32> to vector<8x8xf32>
    %51 = arith.subf %47, %50 : vector<8x8xf32>
    %52 = math.exp %51 : vector<8x8xf32>
    %cst_23 = arith.constant dense<0.000000e+00> : vector<8xf32>
    %53 = vector.multi_reduction <add>, %52, %cst_23 [1] : vector<8x8xf32> to vector<8xf32>
    %54 = vector.shape_cast %53 : vector<8xf32> to vector<8x1xf32>
    %55 = vector.broadcast %54 : vector<8x1xf32> to vector<8x8xf32>
    %56 = arith.divf %52, %55 : vector<8x8xf32>
    %cst_24 = arith.constant dense<0.000000e+00> : vector<8x16xf32>
    %57 = tpu.matmul %56, %44, %cst_24 {dimension_numbers = #tpu.dot_dimension_numbers<[1], [0], [0], [1], [0, 0, 1, 1], [], []>} : vector<8x8xf32>, vector<8x16xf32>, vector<8x16xf32> -> vector<8x16xf32>
    %58 = vector.extract_strided_slice %9 {offsets = [0, 48], sizes = [8, 16], strides = [1, 1]} : vector<8x192xf32> to vector<8x16xf32>
    %59 = vector.extract_strided_slice %9 {offsets = [0, 112], sizes = [8, 16], strides = [1, 1]} : vector<8x192xf32> to vector<8x16xf32>
    %60 = vector.extract_strided_slice %9 {offsets = [0, 176], sizes = [8, 16], strides = [1, 1]} : vector<8x192xf32> to vector<8x16xf32>
    %cst_25 = arith.constant dense<0.000000e+00> : vector<8x8xf32>
    %61 = tpu.matmul %58, %59, %cst_25 {dimension_numbers = #tpu.dot_dimension_numbers<[1], [1], [0], [0], [0, 0, 1, 0], [], []>} : vector<8x16xf32>, vector<8x16xf32>, vector<8x8xf32> -> vector<8x8xf32>
    %cst_26 = arith.constant 2.500000e-01 : f32
    %62 = vector.broadcast %cst_26 : f32 to vector<8x8xf32>
    %63 = arith.mulf %61, %62 : vector<8x8xf32>
    %cst_27 = arith.constant dense<0xFF800000> : vector<8xf32>
    %64 = vector.multi_reduction <maximumf>, %63, %cst_27 [1] : vector<8x8xf32> to vector<8xf32>
    %65 = vector.shape_cast %64 : vector<8xf32> to vector<8x1xf32>
    %66 = vector.broadcast %65 : vector<8x1xf32> to vector<8x8xf32>
    %67 = arith.subf %63, %66 : vector<8x8xf32>
    %68 = math.exp %67 : vector<8x8xf32>
    %cst_28 = arith.constant dense<0.000000e+00> : vector<8xf32>
    %69 = vector.multi_reduction <add>, %68, %cst_28 [1] : vector<8x8xf32> to vector<8xf32>
    %70 = vector.shape_cast %69 : vector<8xf32> to vector<8x1xf32>
    %71 = vector.broadcast %70 : vector<8x1xf32> to vector<8x8xf32>
    %72 = arith.divf %68, %71 : vector<8x8xf32>
    %cst_29 = arith.constant dense<0.000000e+00> : vector<8x16xf32>
    %73 = tpu.matmul %72, %60, %cst_29 {dimension_numbers = #tpu.dot_dimension_numbers<[1], [0], [0], [1], [0, 0, 1, 1], [], []>} : vector<8x8xf32>, vector<8x16xf32>, vector<8x16xf32> -> vector<8x16xf32>
    %74 = tpu.concatenate %25, %41, %57, %73 in 1 : vector<8x16xf32>, vector<8x16xf32>, vector<8x16xf32>, vector<8x16xf32> -> vector<8x64xf32>
    %c0_30 = arith.constant 0 : index
    %c0_31 = arith.constant 0 : index
    %c0_32 = arith.constant 0 : index
    %75 = vector.load %arg5[%c0_30, %c0_31, %c0_32] : memref<2x64x64xf32, #tpu.memory_space<vmem>>, vector<1x64x64xf32>
    %76 = vector.shape_cast %75 : vector<1x64x64xf32> to vector<64x64xf32>
    %cst_33 = arith.constant dense<0.000000e+00> : vector<8x64xf32>
    %77 = tpu.matmul %74, %76, %cst_33 {dimension_numbers = #tpu.dot_dimension_numbers<[1], [0], [0], [1], [0, 0, 1, 1], [], []>} : vector<8x64xf32>, vector<64x64xf32>, vector<8x64xf32> -> vector<8x64xf32>
    %c0_34 = arith.constant 0 : index
    %c0_35 = arith.constant 0 : index
    %78 = vector.load %arg6[%c0_34, %c0_35] : memref<2x64xf32, #tpu.memory_space<vmem>>, vector<1x64xf32>
    %79 = vector.broadcast %78 : vector<1x64xf32> to vector<8x64xf32>
    %80 = arith.addf %77, %79 : vector<8x64xf32>
    %81 = arith.addf %80, %1 : vector<8x64xf32>
    %c0_36 = arith.constant 0 : index
    %c0_37 = arith.constant 0 : index
    %82 = vector.load %arg7[%c0_36, %c0_37] : memref<6x64xf32, #tpu.memory_space<vmem>>, vector<1x64xf32>
    %c1 = arith.constant 1 : index
    %c0_38 = arith.constant 0 : index
    %83 = vector.load %arg7[%c1, %c0_38] : memref<6x64xf32, #tpu.memory_space<vmem>>, vector<1x64xf32>
    %cst_39 = arith.constant dense<0.000000e+00> : vector<8xf32>
    %84 = vector.multi_reduction <add>, %81, %cst_39 [1] : vector<8x64xf32> to vector<8xf32>
    %85 = vector.shape_cast %84 : vector<8xf32> to vector<8x1xf32>
    %cst_40 = arith.constant 6.400000e+01 : f32
    %86 = vector.broadcast %cst_40 : f32 to vector<8x1xf32>
    %87 = arith.divf %85, %86 : vector<8x1xf32>
    %88 = vector.broadcast %87 : vector<8x1xf32> to vector<8x64xf32>
    %89 = arith.subf %81, %88 : vector<8x64xf32>
    %90 = arith.mulf %89, %89 : vector<8x64xf32>
    %cst_41 = arith.constant dense<0.000000e+00> : vector<8xf32>
    %91 = vector.multi_reduction <add>, %90, %cst_41 [1] : vector<8x64xf32> to vector<8xf32>
    %92 = vector.shape_cast %91 : vector<8xf32> to vector<8x1xf32>
    %cst_42 = arith.constant 6.400000e+01 : f32
    %93 = vector.broadcast %cst_42 : f32 to vector<8x1xf32>
    %94 = arith.divf %92, %93 : vector<8x1xf32>
    %cst_43 = arith.constant 9.99999974E-6 : f32
    %95 = vector.broadcast %cst_43 : f32 to vector<8x1xf32>
    %96 = arith.addf %94, %95 : vector<8x1xf32>
    %97 = math.rsqrt %96 : vector<8x1xf32>
    %98 = vector.broadcast %97 : vector<8x1xf32> to vector<8x64xf32>
    %99 = arith.mulf %89, %98 : vector<8x64xf32>
    %100 = vector.broadcast %82 : vector<1x64xf32> to vector<8x64xf32>
    %101 = arith.mulf %99, %100 : vector<8x64xf32>
    %102 = vector.broadcast %83 : vector<1x64xf32> to vector<8x64xf32>
    %103 = arith.addf %101, %102 : vector<8x64xf32>
    %c1_44 = arith.constant 1 : index
    %c0_45 = arith.constant 0 : index
    %c0_46 = arith.constant 0 : index
    %104 = vector.load %arg3[%c1_44, %c0_45, %c0_46] : memref<2x64x192xf32, #tpu.memory_space<vmem>>, vector<1x64x192xf32>
    %105 = vector.shape_cast %104 : vector<1x64x192xf32> to vector<64x192xf32>
    %cst_47 = arith.constant dense<0.000000e+00> : vector<8x192xf32>
    %106 = tpu.matmul %103, %105, %cst_47 {dimension_numbers = #tpu.dot_dimension_numbers<[1], [0], [0], [1], [0, 0, 1, 1], [], []>} : vector<8x64xf32>, vector<64x192xf32>, vector<8x192xf32> -> vector<8x192xf32>
    %c1_48 = arith.constant 1 : index
    %c0_49 = arith.constant 0 : index
    %107 = vector.load %arg4[%c1_48, %c0_49] : memref<2x192xf32, #tpu.memory_space<vmem>>, vector<1x192xf32>
    %108 = vector.broadcast %107 : vector<1x192xf32> to vector<8x192xf32>
    %109 = arith.addf %106, %108 : vector<8x192xf32>
    %c1_50 = arith.constant 1 : index
    %c0_51 = arith.constant 0 : index
    %c0_52 = arith.constant 0 : index
    %110 = vector.load %arg3[%c1_50, %c0_51, %c0_52] : memref<2x64x192xf32, #tpu.memory_space<vmem>>, vector<1x64x192xf32>
    %111 = vector.shape_cast %110 : vector<1x64x192xf32> to vector<64x192xf32>
    %cst_53 = arith.constant dense<0.000000e+00> : vector<8x192xf32>
    %112 = tpu.matmul %3, %111, %cst_53 {dimension_numbers = #tpu.dot_dimension_numbers<[1], [0], [0], [1], [0, 0, 1, 1], [], []>} : vector<8x64xf32>, vector<64x192xf32>, vector<8x192xf32> -> vector<8x192xf32>
    %c1_54 = arith.constant 1 : index
    %c0_55 = arith.constant 0 : index
    %113 = vector.load %arg4[%c1_54, %c0_55] : memref<2x192xf32, #tpu.memory_space<vmem>>, vector<1x192xf32>
    %114 = vector.broadcast %113 : vector<1x192xf32> to vector<8x192xf32>
    %115 = arith.addf %112, %114 : vector<8x192xf32>
    %116 = vector.extract_strided_slice %109 {offsets = [0, 0], sizes = [8, 16], strides = [1, 1]} : vector<8x192xf32> to vector<8x16xf32>
    %117 = vector.extract_strided_slice %115 {offsets = [0, 64], sizes = [8, 16], strides = [1, 1]} : vector<8x192xf32> to vector<8x16xf32>
    %118 = vector.extract_strided_slice %115 {offsets = [0, 128], sizes = [8, 16], strides = [1, 1]} : vector<8x192xf32> to vector<8x16xf32>
    %cst_56 = arith.constant dense<0.000000e+00> : vector<8x8xf32>
    %119 = tpu.matmul %116, %117, %cst_56 {dimension_numbers = #tpu.dot_dimension_numbers<[1], [1], [0], [0], [0, 0, 1, 0], [], []>} : vector<8x16xf32>, vector<8x16xf32>, vector<8x8xf32> -> vector<8x8xf32>
    %cst_57 = arith.constant 2.500000e-01 : f32
    %120 = vector.broadcast %cst_57 : f32 to vector<8x8xf32>
    %121 = arith.mulf %119, %120 : vector<8x8xf32>
    %cst_58 = arith.constant dense<0xFF800000> : vector<8xf32>
    %122 = vector.multi_reduction <maximumf>, %121, %cst_58 [1] : vector<8x8xf32> to vector<8xf32>
    %123 = vector.shape_cast %122 : vector<8xf32> to vector<8x1xf32>
    %124 = vector.broadcast %123 : vector<8x1xf32> to vector<8x8xf32>
    %125 = arith.subf %121, %124 : vector<8x8xf32>
    %126 = math.exp %125 : vector<8x8xf32>
    %cst_59 = arith.constant dense<0.000000e+00> : vector<8xf32>
    %127 = vector.multi_reduction <add>, %126, %cst_59 [1] : vector<8x8xf32> to vector<8xf32>
    %128 = vector.shape_cast %127 : vector<8xf32> to vector<8x1xf32>
    %129 = vector.broadcast %128 : vector<8x1xf32> to vector<8x8xf32>
    %130 = arith.divf %126, %129 : vector<8x8xf32>
    %cst_60 = arith.constant dense<0.000000e+00> : vector<8x16xf32>
    %131 = tpu.matmul %130, %118, %cst_60 {dimension_numbers = #tpu.dot_dimension_numbers<[1], [0], [0], [1], [0, 0, 1, 1], [], []>} : vector<8x8xf32>, vector<8x16xf32>, vector<8x16xf32> -> vector<8x16xf32>
    %132 = vector.extract_strided_slice %109 {offsets = [0, 16], sizes = [8, 16], strides = [1, 1]} : vector<8x192xf32> to vector<8x16xf32>
    %133 = vector.extract_strided_slice %115 {offsets = [0, 80], sizes = [8, 16], strides = [1, 1]} : vector<8x192xf32> to vector<8x16xf32>
    %134 = vector.extract_strided_slice %115 {offsets = [0, 144], sizes = [8, 16], strides = [1, 1]} : vector<8x192xf32> to vector<8x16xf32>
    %cst_61 = arith.constant dense<0.000000e+00> : vector<8x8xf32>
    %135 = tpu.matmul %132, %133, %cst_61 {dimension_numbers = #tpu.dot_dimension_numbers<[1], [1], [0], [0], [0, 0, 1, 0], [], []>} : vector<8x16xf32>, vector<8x16xf32>, vector<8x8xf32> -> vector<8x8xf32>
    %cst_62 = arith.constant 2.500000e-01 : f32
    %136 = vector.broadcast %cst_62 : f32 to vector<8x8xf32>
    %137 = arith.mulf %135, %136 : vector<8x8xf32>
    %cst_63 = arith.constant dense<0xFF800000> : vector<8xf32>
    %138 = vector.multi_reduction <maximumf>, %137, %cst_63 [1] : vector<8x8xf32> to vector<8xf32>
    %139 = vector.shape_cast %138 : vector<8xf32> to vector<8x1xf32>
    %140 = vector.broadcast %139 : vector<8x1xf32> to vector<8x8xf32>
    %141 = arith.subf %137, %140 : vector<8x8xf32>
    %142 = math.exp %141 : vector<8x8xf32>
    %cst_64 = arith.constant dense<0.000000e+00> : vector<8xf32>
    %143 = vector.multi_reduction <add>, %142, %cst_64 [1] : vector<8x8xf32> to vector<8xf32>
    %144 = vector.shape_cast %143 : vector<8xf32> to vector<8x1xf32>
    %145 = vector.broadcast %144 : vector<8x1xf32> to vector<8x8xf32>
    %146 = arith.divf %142, %145 : vector<8x8xf32>
    %cst_65 = arith.constant dense<0.000000e+00> : vector<8x16xf32>
    %147 = tpu.matmul %146, %134, %cst_65 {dimension_numbers = #tpu.dot_dimension_numbers<[1], [0], [0], [1], [0, 0, 1, 1], [], []>} : vector<8x8xf32>, vector<8x16xf32>, vector<8x16xf32> -> vector<8x16xf32>
    %148 = vector.extract_strided_slice %109 {offsets = [0, 32], sizes = [8, 16], strides = [1, 1]} : vector<8x192xf32> to vector<8x16xf32>
    %149 = vector.extract_strided_slice %115 {offsets = [0, 96], sizes = [8, 16], strides = [1, 1]} : vector<8x192xf32> to vector<8x16xf32>
    %150 = vector.extract_strided_slice %115 {offsets = [0, 160], sizes = [8, 16], strides = [1, 1]} : vector<8x192xf32> to vector<8x16xf32>
    %cst_66 = arith.constant dense<0.000000e+00> : vector<8x8xf32>
    %151 = tpu.matmul %148, %149, %cst_66 {dimension_numbers = #tpu.dot_dimension_numbers<[1], [1], [0], [0], [0, 0, 1, 0], [], []>} : vector<8x16xf32>, vector<8x16xf32>, vector<8x8xf32> -> vector<8x8xf32>
    %cst_67 = arith.constant 2.500000e-01 : f32
    %152 = vector.broadcast %cst_67 : f32 to vector<8x8xf32>
    %153 = arith.mulf %151, %152 : vector<8x8xf32>
    %cst_68 = arith.constant dense<0xFF800000> : vector<8xf32>
    %154 = vector.multi_reduction <maximumf>, %153, %cst_68 [1] : vector<8x8xf32> to vector<8xf32>
    %155 = vector.shape_cast %154 : vector<8xf32> to vector<8x1xf32>
    %156 = vector.broadcast %155 : vector<8x1xf32> to vector<8x8xf32>
    %157 = arith.subf %153, %156 : vector<8x8xf32>
    %158 = math.exp %157 : vector<8x8xf32>
    %cst_69 = arith.constant dense<0.000000e+00> : vector<8xf32>
    %159 = vector.multi_reduction <add>, %158, %cst_69 [1] : vector<8x8xf32> to vector<8xf32>
    %160 = vector.shape_cast %159 : vector<8xf32> to vector<8x1xf32>
    %161 = vector.broadcast %160 : vector<8x1xf32> to vector<8x8xf32>
    %162 = arith.divf %158, %161 : vector<8x8xf32>
    %cst_70 = arith.constant dense<0.000000e+00> : vector<8x16xf32>
    %163 = tpu.matmul %162, %150, %cst_70 {dimension_numbers = #tpu.dot_dimension_numbers<[1], [0], [0], [1], [0, 0, 1, 1], [], []>} : vector<8x8xf32>, vector<8x16xf32>, vector<8x16xf32> -> vector<8x16xf32>
    %164 = vector.extract_strided_slice %109 {offsets = [0, 48], sizes = [8, 16], strides = [1, 1]} : vector<8x192xf32> to vector<8x16xf32>
    %165 = vector.extract_strided_slice %115 {offsets = [0, 112], sizes = [8, 16], strides = [1, 1]} : vector<8x192xf32> to vector<8x16xf32>
    %166 = vector.extract_strided_slice %115 {offsets = [0, 176], sizes = [8, 16], strides = [1, 1]} : vector<8x192xf32> to vector<8x16xf32>
    %cst_71 = arith.constant dense<0.000000e+00> : vector<8x8xf32>
    %167 = tpu.matmul %164, %165, %cst_71 {dimension_numbers = #tpu.dot_dimension_numbers<[1], [1], [0], [0], [0, 0, 1, 0], [], []>} : vector<8x16xf32>, vector<8x16xf32>, vector<8x8xf32> -> vector<8x8xf32>
    %cst_72 = arith.constant 2.500000e-01 : f32
    %168 = vector.broadcast %cst_72 : f32 to vector<8x8xf32>
    %169 = arith.mulf %167, %168 : vector<8x8xf32>
    %cst_73 = arith.constant dense<0xFF800000> : vector<8xf32>
    %170 = vector.multi_reduction <maximumf>, %169, %cst_73 [1] : vector<8x8xf32> to vector<8xf32>
    %171 = vector.shape_cast %170 : vector<8xf32> to vector<8x1xf32>
    %172 = vector.broadcast %171 : vector<8x1xf32> to vector<8x8xf32>
    %173 = arith.subf %169, %172 : vector<8x8xf32>
    %174 = math.exp %173 : vector<8x8xf32>
    %cst_74 = arith.constant dense<0.000000e+00> : vector<8xf32>
    %175 = vector.multi_reduction <add>, %174, %cst_74 [1] : vector<8x8xf32> to vector<8xf32>
    %176 = vector.shape_cast %175 : vector<8xf32> to vector<8x1xf32>
    %177 = vector.broadcast %176 : vector<8x1xf32> to vector<8x8xf32>
    %178 = arith.divf %174, %177 : vector<8x8xf32>
    %cst_75 = arith.constant dense<0.000000e+00> : vector<8x16xf32>
    %179 = tpu.matmul %178, %166, %cst_75 {dimension_numbers = #tpu.dot_dimension_numbers<[1], [0], [0], [1], [0, 0, 1, 1], [], []>} : vector<8x8xf32>, vector<8x16xf32>, vector<8x16xf32> -> vector<8x16xf32>
    %180 = tpu.concatenate %131, %147, %163, %179 in 1 : vector<8x16xf32>, vector<8x16xf32>, vector<8x16xf32>, vector<8x16xf32> -> vector<8x64xf32>
    %c1_76 = arith.constant 1 : index
    %c0_77 = arith.constant 0 : index
    %c0_78 = arith.constant 0 : index
    %181 = vector.load %arg5[%c1_76, %c0_77, %c0_78] : memref<2x64x64xf32, #tpu.memory_space<vmem>>, vector<1x64x64xf32>
    %182 = vector.shape_cast %181 : vector<1x64x64xf32> to vector<64x64xf32>
    %cst_79 = arith.constant dense<0.000000e+00> : vector<8x64xf32>
    %183 = tpu.matmul %180, %182, %cst_79 {dimension_numbers = #tpu.dot_dimension_numbers<[1], [0], [0], [1], [0, 0, 1, 1], [], []>} : vector<8x64xf32>, vector<64x64xf32>, vector<8x64xf32> -> vector<8x64xf32>
    %c1_80 = arith.constant 1 : index
    %c0_81 = arith.constant 0 : index
    %184 = vector.load %arg6[%c1_80, %c0_81] : memref<2x64xf32, #tpu.memory_space<vmem>>, vector<1x64xf32>
    %185 = vector.broadcast %184 : vector<1x64xf32> to vector<8x64xf32>
    %186 = arith.addf %183, %185 : vector<8x64xf32>
    %187 = arith.addf %186, %103 : vector<8x64xf32>
    %c2 = arith.constant 2 : index
    %c0_82 = arith.constant 0 : index
    %188 = vector.load %arg7[%c2, %c0_82] : memref<6x64xf32, #tpu.memory_space<vmem>>, vector<1x64xf32>
    %c3 = arith.constant 3 : index
    %c0_83 = arith.constant 0 : index
    %189 = vector.load %arg7[%c3, %c0_83] : memref<6x64xf32, #tpu.memory_space<vmem>>, vector<1x64xf32>
    %cst_84 = arith.constant dense<0.000000e+00> : vector<8xf32>
    %190 = vector.multi_reduction <add>, %187, %cst_84 [1] : vector<8x64xf32> to vector<8xf32>
    %191 = vector.shape_cast %190 : vector<8xf32> to vector<8x1xf32>
    %cst_85 = arith.constant 6.400000e+01 : f32
    %192 = vector.broadcast %cst_85 : f32 to vector<8x1xf32>
    %193 = arith.divf %191, %192 : vector<8x1xf32>
    %194 = vector.broadcast %193 : vector<8x1xf32> to vector<8x64xf32>
    %195 = arith.subf %187, %194 : vector<8x64xf32>
    %196 = arith.mulf %195, %195 : vector<8x64xf32>
    %cst_86 = arith.constant dense<0.000000e+00> : vector<8xf32>
    %197 = vector.multi_reduction <add>, %196, %cst_86 [1] : vector<8x64xf32> to vector<8xf32>
    %198 = vector.shape_cast %197 : vector<8xf32> to vector<8x1xf32>
    %cst_87 = arith.constant 6.400000e+01 : f32
    %199 = vector.broadcast %cst_87 : f32 to vector<8x1xf32>
    %200 = arith.divf %198, %199 : vector<8x1xf32>
    %cst_88 = arith.constant 9.99999974E-6 : f32
    %201 = vector.broadcast %cst_88 : f32 to vector<8x1xf32>
    %202 = arith.addf %200, %201 : vector<8x1xf32>
    %203 = math.rsqrt %202 : vector<8x1xf32>
    %204 = vector.broadcast %203 : vector<8x1xf32> to vector<8x64xf32>
    %205 = arith.mulf %195, %204 : vector<8x64xf32>
    %206 = vector.broadcast %188 : vector<1x64xf32> to vector<8x64xf32>
    %207 = arith.mulf %205, %206 : vector<8x64xf32>
    %208 = vector.broadcast %189 : vector<1x64xf32> to vector<8x64xf32>
    %209 = arith.addf %207, %208 : vector<8x64xf32>
    %210 = arith.addf %209, %209 : vector<8x64xf32>
    %c4 = arith.constant 4 : index
    %c0_89 = arith.constant 0 : index
    %211 = vector.load %arg7[%c4, %c0_89] : memref<6x64xf32, #tpu.memory_space<vmem>>, vector<1x64xf32>
    %c5 = arith.constant 5 : index
    %c0_90 = arith.constant 0 : index
    %212 = vector.load %arg7[%c5, %c0_90] : memref<6x64xf32, #tpu.memory_space<vmem>>, vector<1x64xf32>
    %cst_91 = arith.constant dense<0.000000e+00> : vector<8xf32>
    %213 = vector.multi_reduction <add>, %210, %cst_91 [1] : vector<8x64xf32> to vector<8xf32>
    %214 = vector.shape_cast %213 : vector<8xf32> to vector<8x1xf32>
    %cst_92 = arith.constant 6.400000e+01 : f32
    %215 = vector.broadcast %cst_92 : f32 to vector<8x1xf32>
    %216 = arith.divf %214, %215 : vector<8x1xf32>
    %217 = vector.broadcast %216 : vector<8x1xf32> to vector<8x64xf32>
    %218 = arith.subf %210, %217 : vector<8x64xf32>
    %219 = arith.mulf %218, %218 : vector<8x64xf32>
    %cst_93 = arith.constant dense<0.000000e+00> : vector<8xf32>
    %220 = vector.multi_reduction <add>, %219, %cst_93 [1] : vector<8x64xf32> to vector<8xf32>
    %221 = vector.shape_cast %220 : vector<8xf32> to vector<8x1xf32>
    %cst_94 = arith.constant 6.400000e+01 : f32
    %222 = vector.broadcast %cst_94 : f32 to vector<8x1xf32>
    %223 = arith.divf %221, %222 : vector<8x1xf32>
    %cst_95 = arith.constant 9.99999974E-6 : f32
    %224 = vector.broadcast %cst_95 : f32 to vector<8x1xf32>
    %225 = arith.addf %223, %224 : vector<8x1xf32>
    %226 = math.rsqrt %225 : vector<8x1xf32>
    %227 = vector.broadcast %226 : vector<8x1xf32> to vector<8x64xf32>
    %228 = arith.mulf %218, %227 : vector<8x64xf32>
    %229 = vector.broadcast %211 : vector<1x64xf32> to vector<8x64xf32>
    %230 = arith.mulf %228, %229 : vector<8x64xf32>
    %231 = vector.broadcast %212 : vector<1x64xf32> to vector<8x64xf32>
    %232 = arith.addf %230, %231 : vector<8x64xf32>
    %c0_96 = arith.constant 0 : index
    %c0_97 = arith.constant 0 : index
    %c0_98 = arith.constant 0 : index
    %233 = vector.load %arg8[%c0_96, %c0_97, %c0_98] : memref<1x8x64xf32, #tpu.memory_space<vmem>>, vector<1x8x64xf32>
    %234 = vector.shape_cast %233 : vector<1x8x64xf32> to vector<8x64xf32>
    %235 = vector.shape_cast %232 : vector<8x64xf32> to vector<1x8x64xf32>
    tpu.vector_store %arg8[%c0_96, %c0_97, %c0_98], %235 {strides = array<i32>} : memref<1x8x64xf32, #tpu.memory_space<vmem>>, vector<1x8x64xf32>,
    return
  }
  func.func @transform_0(%arg0: i32) -> (i32, i32, i32) {
    %c0_i32 = arith.constant 0 : i32
    %c0_i32_0 = arith.constant 0 : i32
    %c0_i32_1 = arith.constant 0 : i32
    return %arg0, %c0_i32, %c0_i32_0 : i32, i32, i32
  }
  func.func @transform_1(%arg0: i32) -> (i32, i32, i32) {
    %c0_i32 = arith.constant 0 : i32
    %c0_i32_0 = arith.constant 0 : i32
    %c0_i32_1 = arith.constant 0 : i32
    return %arg0, %c0_i32, %c0_i32_0 : i32, i32, i32
  }
  func.func @transform_2(%arg0: i32) -> (i32, i32, i32) {
    %c0_i32 = arith.constant 0 : i32
    %c0_i32_0 = arith.constant 0 : i32
    %c0_i32_1 = arith.constant 0 : i32
    %c0_i32_2 = arith.constant 0 : i32
    return %c0_i32, %c0_i32_0, %c0_i32_1 : i32, i32, i32
  }
  func.func @transform_3(%arg0: i32) -> (i32, i32) {
    %c0_i32 = arith.constant 0 : i32
    %c0_i32_0 = arith.constant 0 : i32
    %c0_i32_1 = arith.constant 0 : i32
    return %c0_i32, %c0_i32_0 : i32, i32
  }
  func.func @transform_4(%arg0: i32) -> (i32, i32, i32) {
    %c0_i32 = arith.constant 0 : i32
    %c0_i32_0 = arith.constant 0 : i32
    %c0_i32_1 = arith.constant 0 : i32
    %c0_i32_2 = arith.constant 0 : i32
    return %c0_i32, %c0_i32_0, %c0_i32_1 : i32, i32, i32
  }
  func.func @transform_5(%arg0: i32) -> (i32, i32) {
    %c0_i32 = arith.constant 0 : i32
    %c0_i32_0 = arith.constant 0 : i32
    %c0_i32_1 = arith.constant 0 : i32
    return %c0_i32, %c0_i32_0 : i32, i32
  }
  func.func @transform_6(%arg0: i32) -> (i32, i32) {
    %c0_i32 = arith.constant 0 : i32
    %c0_i32_0 = arith.constant 0 : i32
    %c0_i32_1 = arith.constant 0 : i32
    return %c0_i32, %c0_i32_0 : i32, i32
  }
  func.func @transform_7(%arg0: i32) -> (i32, i32, i32) {
    %c0_i32 = arith.constant 0 : i32
    %c0_i32_0 = arith.constant 0 : i32
    %c0_i32_1 = arith.constant 0 : i32
    return %arg0, %c0_i32, %c0_i32_0 : i32, i32, i32
  }
}

</mosaic_0001>

<llo_original>
// kernel: decoder_block.1
$region0: #{decoder_block.1}
  #allocation0 [shape = 'u32[]', space=smem, size = 0x4, offset = 0x4, fixed_abs, tag = 'smem constant byte address 0x4 - core index']
  #allocation1 [shape = 'u32[144,128]{1,0:T(1,128)}', space=vmem, size = 0x12000, scoped, tag = 'internal scratch']
  %s0 = inlined_call_operand.hbm [shape: f32[2,8,64], index: 0, kind: input, shape index: {}]
  %s1 = inlined_call_operand.hbm [shape: f32[2,8,64], index: 1, kind: input, shape index: {}]
  %s2 = inlined_call_operand.hbm [shape: f32[2,64,192], index: 2, kind: input, shape index: {}]
  %s3 = inlined_call_operand.vmem [shape: f32[2,192], index: 3, kind: input, shape index: {}]
  %s4 = inlined_call_operand.hbm [shape: f32[2,64,64], index: 4, kind: input, shape index: {}]
  %s5 = inlined_call_operand.vmem [shape: f32[2,64], index: 5, kind: input, shape index: {}]
  %s6 = inlined_call_operand.vmem [shape: f32[6,64], index: 6, kind: input, shape index: {}]
  %s7 = inlined_call_operand.hbm [shape: f32[2,8,64], index: 7, kind: output, shape index: {}]
  %s8 = sld [smem:[#allocation0]]
  $region77: #{decoder_block.1} parent=0
    _
  %s10 = ssub.s32 1, %s8
  %s11 = scalar_select 0, %s10, %s8
  $region1: #{decoder_block.1} parent=0
    #allocation2 [shape = 'u8[8192]{0}', space=vmem, size = 0x2000, scoped, tag = 'input window, operand 0']
    #allocation3 [shape = 's32[2]{0}', space=sflag, size = 0x8, scoped, tag = 'scoped memory for decoder_block.1']
    #allocation4 [shape = 's32[2]{0}', space=sflag, size = 0x8, scoped, tag = 'scoped memory for decoder_block.1']
    #allocation5 [shape = 'u8[8192]{0}', space=vmem, size = 0x2000, scoped, tag = 'input window, operand 1']
    #allocation6 [shape = 's32[2]{0}', space=sflag, size = 0x8, scoped, tag = 'scoped memory for decoder_block.1']
    #allocation7 [shape = 'u8[131072]{0}', space=vmem, size = 0x20000, scoped, tag = 'input window, operand 2, single buffered']
    #allocation8 [shape = 'u8[65536]{0}', space=vmem, size = 0x10000, scoped, tag = 'input window, operand 4, single buffered']
    #allocation9 [shape = 's32[1]{0}', space=sflag, size = 0x4, scoped, tag = 'scoped memory for decoder_block.1']
    #allocation10 [shape = 'u8[8192]{0}', space=vmem, size = 0x2000, scoped, tag = 'output window, operand 0']
    %12 = vsyncpa [#allocation3], 0
    %s13 = scalar_lea.sflag [#allocation3], 1
    %14 = vsyncpa %s13, 0
    %15 = vsyncpa [#allocation6], 0
    %s16 = scalar_lea.sflag [#allocation6], 1
    %17 = vsyncpa %s16, 0
    %18 = vsyncpa [#allocation9], 0
    %19 = vsyncpa [#allocation4], 0
    %s20 = scalar_lea.sflag [#allocation4], 1
    %21 = vsyncpa %s20, 0
    loop: start=0, step=1, limit=4
    $region2: #{decoder_block.1} parent=1 // loop_pre_header
      _
    $region3: #{decoder_block.1} parent=1 // loop_header
      %s23 = sphi 0, %s27
      %p24 = scmp.ge.s32.totalorder %s23, 4
      %s33 = sphi 0, %s35
      %s36 = sphi 0, %s33
      %s37 = sphi 0, %s36
      %s53 = sphi 0, %s37
      %s59 = sphi 0, %s61
      %s62 = sphi 0, %s59
      %s63 = sphi 0, %s62
      %s79 = sphi 0, %s63
      %s83 = sphi 0, %s83
      %s85 = sphi 0, %s83
      %s86 = sphi 0, %s85
      %s100 = sphi 0, %s86
      %s104 = sphi 0, %s104
      %s106 = sphi 0, %s104
      %s107 = sphi 0, %s106
      %s121 = sphi 0, %s107
      %s125 = sphi 0, %s125
      %s127 = sphi 0, %s125
      %s128 = sphi 0, %s127
      %s142 = sphi 0, %s128
      %s146 = sphi 0, %s146
      %s148 = sphi 0, %s146
      %s149 = sphi 0, %s148
      %s163 = sphi 0, %s149
      %s167 = sphi 0, %s167
      %s169 = sphi 0, %s167
      %s170 = sphi 0, %s169
      %s184 = sphi 0, %s170
      %s190 = sphi 0, %s192
      %s193 = sphi 0, %s190
      %s194 = sphi 0, %s193
      %s210 = sphi 0, %s194
    $region4: #{decoder_block.1} parent=1 // loop_header_branch
      %26 = sbr.rel (%p24) target = $region8
    $region5: #{decoder_block.1} parent=1 // loop_body
      %s28 = ssub.s32 %s23, 1
      %s29 = ssub.s32 %s23, 2
      %s30 = sadd.s32 %s23, 1
      %s31 = ssub.s32 %s23, %s30
      %p32 = scmp.eq.s32.totalorder %s31, 0
      %s34 = sadd.s32 %s33, 1
      %s35 = scalar_select %p32, %s33, %s34
      %p38 = pneg %p32
      %p39 = scmp.eq.s32.totalorder %s23, 1
      %p40 = por %p38, %p39
      %p41 = scmp.ne.s32.totalorder %s33, %s36
      %p42 = scmp.eq.s32.totalorder %s23, 0
      %p43 = por %p41, %p42
      %p44 = scmp.ne.s32.totalorder %s33, %s36
      %p45 = scmp.eq.s32.totalorder %s28, 1
      %p46 = por %p44, %p45
      %p47 = scmp.ne.s32.totalorder %s36, %s37
      %p48 = scmp.eq.s32.totalorder %s28, 0
      %p49 = por %p47, %p48
      %p50 = scmp.ne.s32.totalorder %s36, %s37
      %p51 = scmp.eq.s32.totalorder %s29, 1
      %p52 = por %p50, %p51
      %p54 = scmp.ne.s32.totalorder %s37, %s53
      %p55 = scmp.eq.s32.totalorder %s29, 0
      %p56 = por %p54, %p55
      %s57 = ssub.s32 %s23, %s30
      %p58 = scmp.eq.s32.totalorder %s57, 0
      %s60 = sadd.s32 %s59, 1
      %s61 = scalar_select %p58, %s59, %s60
      %p64 = pneg %p58
      %p65 = scmp.eq.s32.totalorder %s23, 1
      %p66 = por %p64, %p65
      %p67 = scmp.ne.s32.totalorder %s59, %s62
      %p68 = scmp.eq.s32.totalorder %s23, 0
      %p69 = por %p67, %p68
      %p70 = scmp.ne.s32.totalorder %s59, %s62
      %p71 = scmp.eq.s32.totalorder %s28, 1
      %p72 = por %p70, %p71
      %p73 = scmp.ne.s32.totalorder %s62, %s63
      %p74 = scmp.eq.s32.totalorder %s28, 0
      %p75 = por %p73, %p74
      %p76 = scmp.ne.s32.totalorder %s62, %s63
      %p77 = scmp.eq.s32.totalorder %s29, 1
      %p78 = por %p76, %p77
      %p80 = scmp.ne.s32.totalorder %s63, %s79
      %p81 = scmp.eq.s32.totalorder %s29, 0
      %p82 = por %p80, %p81
      %s84 = sadd.s32 %s83, 1
      %p87 = scmp.eq.s32.totalorder %s23, 1
      %p88 = scmp.ne.s32.totalorder %s83, %s85
      %p89 = scmp.eq.s32.totalorder %s23, 0
      %p90 = por %p88, %p89
      %p91 = scmp.ne.s32.totalorder %s83, %s85
      %p92 = scmp.eq.s32.totalorder %s28, 1
      %p93 = por %p91, %p92
      %p94 = scmp.ne.s32.totalorder %s85, %s86
      %p95 = scmp.eq.s32.totalorder %s28, 0
      %p96 = por %p94, %p95
      %p97 = scmp.ne.s32.totalorder %s85, %s86
      %p98 = scmp.eq.s32.totalorder %s29, 1
      %p99 = por %p97, %p98
      %p101 = scmp.ne.s32.totalorder %s86, %s100
      %p102 = scmp.eq.s32.totalorder %s29, 0
      %p103 = por %p101, %p102
      %s105 = sadd.s32 %s104, 1
      %p108 = scmp.eq.s32.totalorder %s23, 1
      %p109 = scmp.ne.s32.totalorder %s104, %s106
      %p110 = scmp.eq.s32.totalorder %s23, 0
      %p111 = por %p109, %p110
      %p112 = scmp.ne.s32.totalorder %s104, %s106
      %p113 = scmp.eq.s32.totalorder %s28, 1
      %p114 = por %p112, %p113
      %p115 = scmp.ne.s32.totalorder %s106, %s107
      %p116 = scmp.eq.s32.totalorder %s28, 0
      %p117 = por %p115, %p116
      %p118 = scmp.ne.s32.totalorder %s106, %s107
      %p119 = scmp.eq.s32.totalorder %s29, 1
      %p120 = por %p118, %p119
      %p122 = scmp.ne.s32.totalorder %s107, %s121
      %p123 = scmp.eq.s32.totalorder %s29, 0
      %p124 = por %p122, %p123
      %s126 = sadd.s32 %s125, 1
      %p129 = scmp.eq.s32.totalorder %s23, 1
      %p130 = scmp.ne.s32.totalorder %s125, %s127
      %p131 = scmp.eq.s32.totalorder %s23, 0
      %p132 = por %p130, %p131
      %p133 = scmp.ne.s32.totalorder %s125, %s127
      %p134 = scmp.eq.s32.totalorder %s28, 1
      %p135 = por %p133, %p134
      %p136 = scmp.ne.s32.totalorder %s127, %s128
      %p137 = scmp.eq.s32.totalorder %s28, 0
      %p138 = por %p136, %p137
      %p139 = scmp.ne.s32.totalorder %s127, %s128
      %p140 = scmp.eq.s32.totalorder %s29, 1
      %p141 = por %p139, %p140
      %p143 = scmp.ne.s32.totalorder %s128, %s142
      %p144 = scmp.eq.s32.totalorder %s29, 0
      %p145 = por %p143, %p144
      %s147 = sadd.s32 %s146, 1
      %p150 = scmp.eq.s32.totalorder %s23, 1
      %p151 = scmp.ne.s32.totalorder %s146, %s148
      %p152 = scmp.eq.s32.totalorder %s23, 0
      %p153 = por %p151, %p152
      %p154 = scmp.ne.s32.totalorder %s146, %s148
      %p155 = scmp.eq.s32.totalorder %s28, 1
      %p156 = por %p154, %p155
      %p157 = scmp.ne.s32.totalorder %s148, %s149
      %p158 = scmp.eq.s32.totalorder %s28, 0
      %p159 = por %p157, %p158
      %p160 = scmp.ne.s32.totalorder %s148, %s149
      %p161 = scmp.eq.s32.totalorder %s29, 1
      %p162 = por %p160, %p161
      %p164 = scmp.ne.s32.totalorder %s149, %s163
      %p165 = scmp.eq.s32.totalorder %s29, 0
      %p166 = por %p164, %p165
      %s168 = sadd.s32 %s167, 1
      %p171 = scmp.eq.s32.totalorder %s23, 1
      %p172 = scmp.ne.s32.totalorder %s167, %s169
      %p173 = scmp.eq.s32.totalorder %s23, 0
      %p174 = por %p172, %p173
      %p175 = scmp.ne.s32.totalorder %s167, %s169
      %p176 = scmp.eq.s32.totalorder %s28, 1
      %p177 = por %p175, %p176
      %p178 = scmp.ne.s32.totalorder %s169, %s170
      %p179 = scmp.eq.s32.totalorder %s28, 0
      %p180 = por %p178, %p179
      %p181 = scmp.ne.s32.totalorder %s169, %s170
      %p182 = scmp.eq.s32.totalorder %s29, 1
      %p183 = por %p181, %p182
      %p185 = scmp.ne.s32.totalorder %s170, %s184
      %p186 = scmp.eq.s32.totalorder %s29, 0
      %p187 = por %p185, %p186
      %s188 = ssub.s32 %s23, %s30
      %p189 = scmp.eq.s32.totalorder %s188, 0
      %s191 = sadd.s32 %s190, 1
      %s192 = scalar_select %p189, %s190, %s191
      %p195 = pneg %p189
      %p196 = scmp.eq.s32.totalorder %s23, 1
      %p197 = por %p195, %p196
      %p198 = scmp.ne.s32.totalorder %s190, %s193
      %p199 = scmp.eq.s32.totalorder %s23, 0
      %p200 = por %p198, %p199
      %p201 = scmp.ne.s32.totalorder %s190, %s193
      %p202 = scmp.eq.s32.totalorder %s28, 1
      %p203 = por %p201, %p202
      %p204 = scmp.ne.s32.totalorder %s193, %s194
      %p205 = scmp.eq.s32.totalorder %s28, 0
      %p206 = por %p204, %p205
      %p207 = scmp.ne.s32.totalorder %s193, %s194
      %p208 = scmp.eq.s32.totalorder %s29, 1
      %p209 = por %p207, %p208
      %p211 = scmp.ne.s32.totalorder %s194, %s210
      %p212 = scmp.eq.s32.totalorder %s29, 0
      %p213 = por %p211, %p212
      %p214 = scmp.le.s32.totalorder 1, %s23
      %p215 = scmp.lt.s32.totalorder %s23, 3
      %p216 = pnand %p214, %p215
      %p217 = pneg %p216
      // Predicated region
      $region9: #{decoder_block.1} parent=5 // pred_check
        _
      $region10: #{decoder_block.1} parent=5 // pred_check_branch
        %219 = sbr.rel (%p216) target = $region12
      $region11: #{decoder_block.1} parent=5 // pred_region
        %s220 = ssub.s32 %s23, 1
        // Predicated region
        $region13: #{decoder_block.1} parent=11 // pred_check
          %p221 = pneg %p96
        $region14: #{decoder_block.1} parent=11 // pred_check_branch
          %223 = sbr.rel (%p221) target = $region16
        $region15: #{decoder_block.1} parent=11 // pred_region
          %s225 = ssub.s32 4096, 4096
          %226 = vsyncadd [#allocation6], %s225
          %s227 = sshll.u32 [#allocation7], 4
          %s228 = int_to_ptr.vmem [resolvable:$true] %s227
          %233 = dma.hbm_to_vmem [thread:$0]  %s2, 4096, %s228, [#allocation6], 256, 256, 16
        $region16: #{decoder_block.1} parent=11 // pred_fallthru
          _
        // Predicated region
        $region17: #{decoder_block.1} parent=11 // pred_check
          %p234 = pneg %p117
        $region18: #{decoder_block.1} parent=11 // pred_check_branch
          %236 = sbr.rel (%p234) target = $region20
        $region19: #{decoder_block.1} parent=11 // pred_region
          _
        $region20: #{decoder_block.1} parent=11 // pred_fallthru
          _
        // Predicated region
        $region21: #{decoder_block.1} parent=11 // pred_check
          %p237 = pneg %p138
        $region22: #{decoder_block.1} parent=11 // pred_check_branch
          %239 = sbr.rel (%p237) target = $region24
        $region23: #{decoder_block.1} parent=11 // pred_region
          %s241 = ssub.s32 2048, 2048
          %242 = vsyncadd [#allocation9], %s241
          %s243 = sshll.u32 [#allocation8], 4
          %s244 = int_to_ptr.vmem [resolvable:$true] %s243
          %249 = dma.hbm_to_vmem [thread:$0]  %s4, 2048, %s244, [#allocation9], 128, 128, 8
        $region24: #{decoder_block.1} parent=11 // pred_fallthru
          _
        // Predicated region
        $region25: #{decoder_block.1} parent=11 // pred_check
          %p250 = pneg %p159
        $region26: #{decoder_block.1} parent=11 // pred_check_branch
          %252 = sbr.rel (%p250) target = $region28
        $region27: #{decoder_block.1} parent=11 // pred_region
          _
        $region28: #{decoder_block.1} parent=11 // pred_fallthru
          _
        // Predicated region
        $region29: #{decoder_block.1} parent=11 // pred_check
          %p253 = pneg %p180
        $region30: #{decoder_block.1} parent=11 // pred_check_branch
          %255 = sbr.rel (%p253) target = $region32
        $region31: #{decoder_block.1} parent=11 // pred_region
          _
        $region32: #{decoder_block.1} parent=11 // pred_fallthru
          _
      $region12: #{decoder_block.1} parent=5 // pred_fallthru
        _
      %p256 = scmp.lt.s32.totalorder %s23, 2
      // Predicated region
      $region33: #{decoder_block.1} parent=5 // pred_check
        %p257 = pneg %p256
      $region34: #{decoder_block.1} parent=5 // pred_check_branch
        %259 = sbr.rel (%p257) target = $region36
      $region35: #{decoder_block.1} parent=5 // pred_region
        // Predicated region
        $region37: #{decoder_block.1} parent=35 // pred_check
          %p260 = pneg %p43
        $region38: #{decoder_block.1} parent=35 // pred_check_branch
          %262 = sbr.rel (%p260) target = $region40
        $region39: #{decoder_block.1} parent=35 // pred_region
          %s263 = sand.u32 %s33, 1
          %s264 = scalar_lea.sflag [#allocation3], %s263
          %s265 = sand.u32 %s33, 1
          %s266 = smul.addr %s265, 8
          %s267 = scalar_lea.vmem [#allocation2], %s266
          %s269 = ssub.s32 128, 128
          %270 = vsyncadd %s264, %s269
          %s271 = smul.addr %s23, 128
          %s272 = scalar_lea.hbm %s0, %s271
          %s274 = sshll.u32 %s267, 4
          %s275 = int_to_ptr.vmem [resolvable:$true] %s274
          %277 = dma.hbm_to_vmem [thread:$0]  %s272, 128, %s275, %s264
        $region40: #{decoder_block.1} parent=35 // pred_fallthru
          _
        // Predicated region
        $region41: #{decoder_block.1} parent=35 // pred_check
          %p278 = pneg %p69
        $region42: #{decoder_block.1} parent=35 // pred_check_branch
          %280 = sbr.rel (%p278) target = $region44
        $region43: #{decoder_block.1} parent=35 // pred_region
          %s281 = sand.u32 %s23, 1
          %s282 = scalar_lea.sflag [#allocation6], %s281
          %s283 = sand.u32 %s59, 1
          %s284 = smul.addr %s283, 8
          %s285 = scalar_lea.vmem [#allocation5], %s284
          %s287 = ssub.s32 128, 128
          %288 = vsyncadd %s282, %s287
          %s289 = smul.addr %s23, 128
          %s290 = scalar_lea.hbm %s1, %s289
          %s292 = sshll.u32 %s285, 4
          %s293 = int_to_ptr.vmem [resolvable:$true] %s292
          %295 = dma.hbm_to_vmem [thread:$0]  %s290, 128, %s293, %s282
        $region44: #{decoder_block.1} parent=35 // pred_fallthru
          _
      $region36: #{decoder_block.1} parent=5 // pred_fallthru
        _
      %p296 = scmp.le.s32.totalorder 1, %s23
      %p297 = scmp.lt.s32.totalorder %s23, 3
      %p298 = pnand %p296, %p297
      %p299 = pneg %p298
      // Predicated region
      $region45: #{decoder_block.1} parent=5 // pred_check
        _
      $region46: #{decoder_block.1} parent=5 // pred_check_branch
        %301 = sbr.rel (%p298) target = $region48
      $region47: #{decoder_block.1} parent=5 // pred_region
        %s302 = ssub.s32 %s23, 1
        %s303 = sand.u32 %s36, 1
        %s304 = scalar_lea.sflag [#allocation3], %s303
        %s305 = sand.u32 %s36, 1
        %s306 = smul.addr %s305, 8
        %s307 = scalar_lea.vmem [#allocation2], %s306
        // Predicated region
        $region49: #{decoder_block.1} parent=47 // pred_check
          %p308 = pneg %p49
        $region50: #{decoder_block.1} parent=47 // pred_check_branch
          %310 = sbr.rel (%p308) target = $region52
        $region51: #{decoder_block.1} parent=47 // pred_region
          %311 = dma.done %s304, 128
        $region52: #{decoder_block.1} parent=47 // pred_fallthru
          _
        %s312 = sand.u32 %s28, 1
        %s313 = scalar_lea.sflag [#allocation6], %s312
        %s314 = sand.u32 %s62, 1
        %s315 = smul.addr %s314, 8
        %s316 = scalar_lea.vmem [#allocation5], %s315
        // Predicated region
        $region53: #{decoder_block.1} parent=47 // pred_check
          %p317 = pneg %p75
        $region54: #{decoder_block.1} parent=47 // pred_check_branch
          %319 = sbr.rel (%p317) target = $region56
        $region55: #{decoder_block.1} parent=47 // pred_region
          %320 = dma.done %s313, 128
        $region56: #{decoder_block.1} parent=47 // pred_fallthru
          _
        // Predicated region
        $region57: #{decoder_block.1} parent=47 // pred_check
          %p321 = pneg %p96
        $region58: #{decoder_block.1} parent=47 // pred_check_branch
          %323 = sbr.rel (%p321) target = $region60
        $region59: #{decoder_block.1} parent=47 // pred_region
          %324 = dma.done [#allocation6], 4096
        $region60: #{decoder_block.1} parent=47 // pred_fallthru
          _
        // Predicated region
        $region61: #{decoder_block.1} parent=47 // pred_check
          %p325 = pneg %p138
        $region62: #{decoder_block.1} parent=47 // pred_check_branch
          %327 = sbr.rel (%p325) target = $region64
        $region63: #{decoder_block.1} parent=47 // pred_region
          %328 = dma.done [#allocation9], 2048
        $region64: #{decoder_block.1} parent=47 // pred_fallthru
          _
        %s329 = sand.u32 %s36, 1
        %s330 = scalar_lea.sflag [#allocation3], %s329
        %s331 = sand.u32 %s36, 1
        %s332 = smul.addr %s331, 8
        %s333 = scalar_lea.vmem [#allocation2], %s332
        %p334 = pneg %p49
        %p335 = pneg %p46
        %s336 = sand.u32 %s28, 1
        %s337 = scalar_lea.sflag [#allocation6], %s336
        %s338 = sand.u32 %s62, 1
        %s339 = smul.addr %s338, 8
        %s340 = scalar_lea.vmem [#allocation5], %s339
        %p341 = pneg %p75
        %p342 = pneg %p72
        %p343 = pneg %p96
        %p344 = pneg %p93
        %p345 = pneg %p117
        %p346 = pneg %p114
        %p347 = pneg %p138
        %p348 = pneg %p135
        %p349 = pneg %p159
        %p350 = pneg %p156
        %p351 = pneg %p180
        %p352 = pneg %p177
        %p353 = pneg %p206
        %p354 = pneg %p203
        %s355 = sand.u32 %s193, 1
        %s356 = scalar_lea.sflag [#allocation4], %s355
        %s357 = sand.u32 %s193, 1
        %s358 = smul.addr %s357, 8
        %s359 = scalar_lea.vmem [#allocation10], %s358
        %v360 = vld [vmem:[%s307] sm:$0xff]
        %v361 = vld [vmem:[%s316] sm:$0xff]
        %v362 = vld [vmem:[#allocation7] sm:$0xff]
        %v363 = vld [vmem:[#allocation7 + $0x8] sm:$0xff]
        %v364 = vld [vmem:[#allocation7 + $0x10] sm:$0xff]
        %v365 = vld [vmem:[#allocation7 + $0x18] sm:$0xff]
        %v366 = vld [vmem:[#allocation7 + $0x20] sm:$0xff]
        %v367 = vld [vmem:[#allocation7 + $0x28] sm:$0xff]
        %v368 = vld [vmem:[#allocation7 + $0x30] sm:$0xff]
        %v369 = vld [vmem:[#allocation7 + $0x38] sm:$0xff]
        %v370 = vld [vmem:[#allocation7 + $0x40] sm:$0xff]
        %v371 = vld [vmem:[#allocation7 + $0x48] sm:$0xff]
        %v372 = vld [vmem:[#allocation7 + $0x50] sm:$0xff]
        %v373 = vld [vmem:[#allocation7 + $0x58] sm:$0xff]
        %v374 = vld [vmem:[#allocation7 + $0x60] sm:$0xff]
        %v375 = vld [vmem:[#allocation7 + $0x68] sm:$0xff]
        %v376 = vld [vmem:[#allocation7 + $0x70] sm:$0xff]
        %v377 = vld [vmem:[#allocation7 + $0x78] sm:$0xff]
        %v378 = vld [vmem:[%s3] ss:$2 sm:$0x3]
        %v380 = vlaneseq
        %v381 = vshrl.u32 %v380, 7
        %v382 = vsub.s32 0, %v381
        %v383 = vrot.slane %v378, %v382
        %v384 = vlaneseq
        %v385 = vshrl.u32 %v384, 7
        %v386 = vsub.s32 1, %v385
        %v387 = vrot.slane %v378, %v386
        %vm390 = vcmask 523264
        %v392 = vsel %vm390, %v360, 0
        %394 = vmatprep.subr.mxu0 %v363
        %395 = vmatpush1.msra.mxu0 %v362
        %396 = vmatprep.subr.mxu0 %v365
        %397 = vmatpush1.msra.mxu0 %v364
        %398 = vmatprep.subr.mxu0 %v367
        %399 = vmatpush1.msra.mxu0 %v366
        %400 = vmatprep.subr.mxu0 %v369
        %401 = vmatpush1.msra.mxu0 %v368
        %402 = vmatprep.subr.mxu0 %v371
        %403 = vmatpush1.msra.mxu0 %v370
        %404 = vmatprep.subr.mxu0 %v373
        %405 = vmatpush1.msra.mxu0 %v372
        %406 = vmatprep.subr.mxu0 %v375
        %407 = vmatpush1.msra.mxu0 %v374
        %408 = vmatprep.subr.mxu0 %v377
        %409 = vmatpush1.msra.mxu0 %v376
        %410 = vmatprep.subr.mxu0 0.0
        %411 = vmatpush1.msra.mxu0 0.0
        %412 = vmatprep.subr.mxu0 0.0
        %413 = vmatpush1.msra.mxu0 0.0
        %414 = vmatprep.subr.mxu0 0.0
        %415 = vmatpush1.msra.mxu0 0.0
        %416 = vmatprep.subr.mxu0 0.0
        %417 = vmatpush1.msra.mxu0 0.0
        %418 = vmatprep.subr.mxu0 0.0
        %419 = vmatpush1.msra.mxu0 0.0
        %420 = vmatprep.subr.mxu0 0.0
        %421 = vmatpush1.msra.mxu0 0.0
        %422 = vmatprep.subr.mxu0 0.0
        %423 = vmatpush1.msra.mxu0 0.0
        %424 = vmatprep.subr.mxu0 0.0
        %425 = vmatpush1.msra.mxu0 0.0
        %426 = vmatprep.subr.mxu0 0.0
        %427 = vmatpush1.msra.mxu0 0.0
        %428 = vmatprep.subr.mxu0 0.0
        %429 = vmatpush1.msra.mxu0 0.0
        %430 = vmatprep.subr.mxu0 0.0
        %431 = vmatpush1.msra.mxu0 0.0
        %432 = vmatprep.subr.mxu0 0.0
        %433 = vmatpush1.msra.mxu0 0.0
        %434 = vmatprep.subr.mxu0 0.0
        %435 = vmatpush1.msra.mxu0 0.0
        %436 = vmatprep.subr.mxu0 0.0
        %437 = vmatpush1.msra.mxu0 0.0
        %438 = vmatprep.subr.mxu0 0.0
        %439 = vmatpush1.msra.mxu0 0.0
        %440 = vmatprep.subr.mxu0 0.0
        %441 = vmatpush1.msra.mxu0 0.0
        %442 = vmatprep.subr.mxu0 0.0
        %443 = vmatpush1.msra.mxu0 0.0
        %444 = vmatprep.subr.mxu0 0.0
        %445 = vmatpush1.msra.mxu0 0.0
        %446 = vmatprep.subr.mxu0 0.0
        %447 = vmatpush1.msra.mxu0 0.0
        %448 = vmatprep.subr.mxu0 0.0
        %449 = vmatpush1.msra.mxu0 0.0
        %450 = vmatprep.subr.mxu0 0.0
        %451 = vmatpush1.msra.mxu0 0.0
        %452 = vmatprep.subr.mxu0 0.0
        %453 = vmatpush1.msra.mxu0 0.0
        %454 = vmatprep.subr.mxu0 0.0
        %455 = vmatpush1.msra.mxu0 0.0
        %456 = vmatprep.subr.mxu0 0.0
        %457 = vmatpush1.msra.mxu0 0.0
        %458 = vmatprep.mubr.f32.mxu0 0.0
        %459 = vmatmul.mubr.f32.gmra.mrb[0].mxu0 %v392
        %v460 = vpop.f32.mrb[0].mxu0
        %v461 = vadd.f32 %v383, %v460
        %v462 = vpop.f32.mrb[0].mxu0
        %v463 = vadd.f32 %v387, %v462
        %464 = vdwg.mxu0
        %466 = vrot.lane.b32.xlu0 %v461, 64
        %v467 = vpop.permute.xlu0 %466
        %vm468 = vcmask 130048
        %v469 = vsel %vm468, %v461, 0
        %v471 = vsel %vm468, %v467, 0
        %473 = vmatprep.subr.mxu0 0.0
        %474 = vmatpush1.xpose.msra.mxu0 %v471
        %475 = vmatprep.subr.mxu0 0.0
        %476 = vmatpush1.xpose.msra.mxu0 0.0
        %477 = vmatprep.subr.mxu0 0.0
        %478 = vmatpush1.xpose.msra.mxu0 0.0
        %479 = vmatprep.subr.mxu0 0.0
        %480 = vmatpush1.xpose.msra.mxu0 0.0
        %481 = vmatprep.subr.mxu0 0.0
        %482 = vmatpush1.xpose.msra.mxu0 0.0
        %483 = vmatprep.subr.mxu0 0.0
        %484 = vmatpush1.xpose.msra.mxu0 0.0
        %485 = vmatprep.subr.mxu0 0.0
        %486 = vmatpush1.xpose.msra.mxu0 0.0
        %487 = vmatprep.subr.mxu0 0.0
        %488 = vmatpush1.xpose.msra.mxu0 0.0
        %489 = vmatprep.subr.mxu0 0.0
        %490 = vmatpush1.xpose.msra.mxu0 0.0
        %491 = vmatprep.subr.mxu0 0.0
        %492 = vmatpush1.xpose.msra.mxu0 0.0
        %493 = vmatprep.subr.mxu0 0.0
        %494 = vmatpush1.xpose.msra.mxu0 0.0
        %495 = vmatprep.subr.mxu0 0.0
        %496 = vmatpush1.xpose.msra.mxu0 0.0
        %497 = vmatprep.subr.mxu0 0.0
        %498 = vmatpush1.xpose.msra.mxu0 0.0
        %499 = vmatprep.subr.mxu0 0.0
        %500 = vmatpush1.xpose.msra.mxu0 0.0
        %501 = vmatprep.subr.mxu0 0.0
        %502 = vmatpush1.xpose.msra.mxu0 0.0
        %503 = vmatprep.subr.mxu0 0.0
        %504 = vmatpush1.xpose.msra.mxu0 0.0
        %505 = vmatprep.subr.mxu0 0.0
        %506 = vmatpush1.xpose.msra.mxu0 0.0
        %507 = vmatprep.subr.mxu0 0.0
        %508 = vmatpush1.xpose.msra.mxu0 0.0
        %509 = vmatprep.subr.mxu0 0.0
        %510 = vmatpush1.xpose.msra.mxu0 0.0
        %511 = vmatprep.subr.mxu0 0.0
        %512 = vmatpush1.xpose.msra.mxu0 0.0
        %513 = vmatprep.subr.mxu0 0.0
        %514 = vmatpush1.xpose.msra.mxu0 0.0
        %515 = vmatprep.subr.mxu0 0.0
        %516 = vmatpush1.xpose.msra.mxu0 0.0
        %517 = vmatprep.subr.mxu0 0.0
        %518 = vmatpush1.xpose.msra.mxu0 0.0
        %519 = vmatprep.subr.mxu0 0.0
        %520 = vmatpush1.xpose.msra.mxu0 0.0
        %521 = vmatprep.subr.mxu0 0.0
        %522 = vmatpush1.xpose.msra.mxu0 0.0
        %523 = vmatprep.subr.mxu0 0.0
        %524 = vmatpush1.xpose.msra.mxu0 0.0
        %525 = vmatprep.subr.mxu0 0.0
        %526 = vmatpush1.xpose.msra.mxu0 0.0
        %527 = vmatprep.subr.mxu0 0.0
        %528 = vmatpush1.xpose.msra.mxu0 0.0
        %529 = vmatprep.subr.mxu0 0.0
        %530 = vmatpush1.xpose.msra.mxu0 0.0
        %531 = vmatprep.subr.mxu0 0.0
        %532 = vmatpush1.xpose.msra.mxu0 0.0
        %533 = vmatprep.subr.mxu0 0.0
        %534 = vmatpush1.xpose.msra.mxu0 0.0
        %535 = vmatprep.subr.mxu0 0.0
        %536 = vmatpush1.xpose.msra.mxu0 0.0
        %537 = vmatprep.mubr.f32.mxu0 0.0
        %538 = vmatmul.mubr.f32.gmra.mrb[0].mxu0 %v469
        %v539 = vpop.f32.mrb[0].mxu0
        %v540 = vadd.f32 0.0, %v539
        %v541 = vpop.f32.mrb[0].mxu0
        %542 = vdwg.mxu0
        %v543 = vmul.f32 %v540, 0.25
        %vm544 = vcmask 64512
        %v545 = vsel %vm544, %v543, -inf
        %546 = vmax.xlane.f32.xlu0 %v545
        %v547 = vpop.xlane.xlu0 %546
        %v548 = vsub.f32 %v543, %v547
        %v549 = vmul.f32 %v548, 1.442695
        %v550 = vpow.pop %v549
        %v551 = vsel %vm544, %v550, 0.0
        %552 = vadd.xlane.f32.xlu0 %v551
        %v553 = vpop.xlane.xlu0 %552
        %v554 = vrcp.pop %v553
        %v555 = vmul.f32 %v550, %v554
        %v557 = vsel %vm544, %v555, 0
        %559 = vmatprep.subr.mxu0 0.0
        %560 = vmatpush1.msra.mxu0 %v463
        %561 = vmatprep.subr.mxu0 0.0
        %562 = vmatpush1.msra.mxu0 0.0
        %563 = vmatprep.subr.mxu0 0.0
        %564 = vmatpush1.msra.mxu0 0.0
        %565 = vmatprep.subr.mxu0 0.0
        %566 = vmatpush1.msra.mxu0 0.0
        %567 = vmatprep.subr.mxu0 0.0
        %568 = vmatpush1.msra.mxu0 0.0
        %569 = vmatprep.subr.mxu0 0.0
        %570 = vmatpush1.msra.mxu0 0.0
        %571 = vmatprep.subr.mxu0 0.0
        %572 = vmatpush1.msra.mxu0 0.0
        %573 = vmatprep.subr.mxu0 0.0
        %574 = vmatpush1.msra.mxu0 0.0
        %575 = vmatprep.subr.mxu0 0.0
        %576 = vmatpush1.msra.mxu0 0.0
        %577 = vmatprep.subr.mxu0 0.0
        %578 = vmatpush1.msra.mxu0 0.0
        %579 = vmatprep.subr.mxu0 0.0
        %580 = vmatpush1.msra.mxu0 0.0
        %581 = vmatprep.subr.mxu0 0.0
        %582 = vmatpush1.msra.mxu0 0.0
        %583 = vmatprep.subr.mxu0 0.0
        %584 = vmatpush1.msra.mxu0 0.0
        %585 = vmatprep.subr.mxu0 0.0
        %586 = vmatpush1.msra.mxu0 0.0
        %587 = vmatprep.subr.mxu0 0.0
        %588 = vmatpush1.msra.mxu0 0.0
        %589 = vmatprep.subr.mxu0 0.0
        %590 = vmatpush1.msra.mxu0 0.0
        %591 = vmatprep.subr.mxu0 0.0
        %592 = vmatpush1.msra.mxu0 0.0
        %593 = vmatprep.subr.mxu0 0.0
        %594 = vmatpush1.msra.mxu0 0.0
        %595 = vmatprep.subr.mxu0 0.0
        %596 = vmatpush1.msra.mxu0 0.0
        %597 = vmatprep.subr.mxu0 0.0
        %598 = vmatpush1.msra.mxu0 0.0
        %599 = vmatprep.subr.mxu0 0.0
        %600 = vmatpush1.msra.mxu0 0.0
        %601 = vmatprep.subr.mxu0 0.0
        %602 = vmatpush1.msra.mxu0 0.0
        %603 = vmatprep.subr.mxu0 0.0
        %604 = vmatpush1.msra.mxu0 0.0
        %605 = vmatprep.subr.mxu0 0.0
        %606 = vmatpush1.msra.mxu0 0.0
        %607 = vmatprep.subr.mxu0 0.0
        %608 = vmatpush1.msra.mxu0 0.0
        %609 = vmatprep.subr.mxu0 0.0
        %610 = vmatpush1.msra.mxu0 0.0
        %611 = vmatprep.subr.mxu0 0.0
        %612 = vmatpush1.msra.mxu0 0.0
        %613 = vmatprep.subr.mxu0 0.0
        %614 = vmatpush1.msra.mxu0 0.0
        %615 = vmatprep.subr.mxu0 0.0
        %616 = vmatpush1.msra.mxu0 0.0
        %617 = vmatprep.subr.mxu0 0.0
        %618 = vmatpush1.msra.mxu0 0.0
        %619 = vmatprep.subr.mxu0 0.0
        %620 = vmatpush1.msra.mxu0 0.0
        %621 = vmatprep.subr.mxu0 0.0
        %622 = vmatpush1.msra.mxu0 0.0
        %623 = vmatprep.mubr.f32.mxu0 0.0
        %624 = vmatmul.mubr.f32.gmra.mrb[0].mxu0 %v557
        %v625 = vpop.f32.mrb[0].mxu0
        %v626 = vadd.f32 0.0, %v625
        %v627 = vpop.f32.mrb[0].mxu0
        %628 = vdwg.mxu0
        %629 = vrot.lane.b32.xlu0 %v461, 112
        %v630 = vpop.permute.xlu0 %629
        %631 = vrot.lane.b32.xlu0 %v461, 48
        %v632 = vpop.permute.xlu0 %631
        %v633 = vsel %vm468, %v630, 0
        %v635 = vsel %vm468, %v632, 0
        %637 = vmatprep.subr.mxu0 0.0
        %638 = vmatpush1.xpose.msra.mxu0 %v635
        %639 = vmatprep.subr.mxu0 0.0
        %640 = vmatpush1.xpose.msra.mxu0 0.0
        %641 = vmatprep.subr.mxu0 0.0
        %642 = vmatpush1.xpose.msra.mxu0 0.0
        %643 = vmatprep.subr.mxu0 0.0
        %644 = vmatpush1.xpose.msra.mxu0 0.0
        %645 = vmatprep.subr.mxu0 0.0
        %646 = vmatpush1.xpose.msra.mxu0 0.0
        %647 = vmatprep.subr.mxu0 0.0
        %648 = vmatpush1.xpose.msra.mxu0 0.0
        %649 = vmatprep.subr.mxu0 0.0
        %650 = vmatpush1.xpose.msra.mxu0 0.0
        %651 = vmatprep.subr.mxu0 0.0
        %652 = vmatpush1.xpose.msra.mxu0 0.0
        %653 = vmatprep.subr.mxu0 0.0
        %654 = vmatpush1.xpose.msra.mxu0 0.0
        %655 = vmatprep.subr.mxu0 0.0
        %656 = vmatpush1.xpose.msra.mxu0 0.0
        %657 = vmatprep.subr.mxu0 0.0
        %658 = vmatpush1.xpose.msra.mxu0 0.0
        %659 = vmatprep.subr.mxu0 0.0
        %660 = vmatpush1.xpose.msra.mxu0 0.0
        %661 = vmatprep.subr.mxu0 0.0
        %662 = vmatpush1.xpose.msra.mxu0 0.0
        %663 = vmatprep.subr.mxu0 0.0
        %664 = vmatpush1.xpose.msra.mxu0 0.0
        %665 = vmatprep.subr.mxu0 0.0
        %666 = vmatpush1.xpose.msra.mxu0 0.0
        %667 = vmatprep.subr.mxu0 0.0
        %668 = vmatpush1.xpose.msra.mxu0 0.0
        %669 = vmatprep.subr.mxu0 0.0
        %670 = vmatpush1.xpose.msra.mxu0 0.0
        %671 = vmatprep.subr.mxu0 0.0
        %672 = vmatpush1.xpose.msra.mxu0 0.0
        %673 = vmatprep.subr.mxu0 0.0
        %674 = vmatpush1.xpose.msra.mxu0 0.0
        %675 = vmatprep.subr.mxu0 0.0
        %676 = vmatpush1.xpose.msra.mxu0 0.0
        %677 = vmatprep.subr.mxu0 0.0
        %678 = vmatpush1.xpose.msra.mxu0 0.0
        %679 = vmatprep.subr.mxu0 0.0
        %680 = vmatpush1.xpose.msra.mxu0 0.0
        %681 = vmatprep.subr.mxu0 0.0
        %682 = vmatpush1.xpose.msra.mxu0 0.0
        %683 = vmatprep.subr.mxu0 0.0
        %684 = vmatpush1.xpose.msra.mxu0 0.0
        %685 = vmatprep.subr.mxu0 0.0
        %686 = vmatpush1.xpose.msra.mxu0 0.0
        %687 = vmatprep.subr.mxu0 0.0
        %688 = vmatpush1.xpose.msra.mxu0 0.0
        %689 = vmatprep.subr.mxu0 0.0
        %690 = vmatpush1.xpose.msra.mxu0 0.0
        %691 = vmatprep.subr.mxu0 0.0
        %692 = vmatpush1.xpose.msra.mxu0 0.0
        %693 = vmatprep.subr.mxu0 0.0
        %694 = vmatpush1.xpose.msra.mxu0 0.0
        %695 = vmatprep.subr.mxu0 0.0
        %696 = vmatpush1.xpose.msra.mxu0 0.0
        %697 = vmatprep.subr.mxu0 0.0
        %698 = vmatpush1.xpose.msra.mxu0 0.0
        %699 = vmatprep.subr.mxu0 0.0
        %700 = vmatpush1.xpose.msra.mxu0 0.0
        %701 = vmatprep.mubr.f32.mxu0 0.0
        %702 = vmatmul.mubr.f32.gmra.mrb[0].mxu0 %v633
        %v703 = vpop.f32.mrb[0].mxu0
        %v704 = vadd.f32 0.0, %v703
        %v705 = vpop.f32.mrb[0].mxu0
        %706 = vdwg.mxu0
        %v707 = vmul.f32 %v704, 0.25
        %v708 = vsel %vm544, %v707, -inf
        %709 = vmax.xlane.f32.xlu0 %v708
        %v710 = vpop.xlane.xlu0 %709
        %v711 = vsub.f32 %v707, %v710
        %v712 = vmul.f32 %v711, 1.442695
        %v713 = vpow.pop %v712
        %v714 = vsel %vm544, %v713, 0.0
        %715 = vadd.xlane.f32.xlu0 %v714
        %v716 = vpop.xlane.xlu0 %715
        %v717 = vrcp.pop %v716
        %v718 = vmul.f32 %v713, %v717
        %720 = vrot.lane.b32.xlu0 %v463, 112
        %v721 = vpop.permute.xlu0 %720
        %v724 = vsel %vm544, %v718, 0
        %726 = vmatprep.subr.mxu0 0.0
        %727 = vmatpush1.msra.mxu0 %v721
        %728 = vmatprep.subr.mxu0 0.0
        %729 = vmatpush1.msra.mxu0 0.0
        %730 = vmatprep.subr.mxu0 0.0
        %731 = vmatpush1.msra.mxu0 0.0
        %732 = vmatprep.subr.mxu0 0.0
        %733 = vmatpush1.msra.mxu0 0.0
        %734 = vmatprep.subr.mxu0 0.0
        %735 = vmatpush1.msra.mxu0 0.0
        %736 = vmatprep.subr.mxu0 0.0
        %737 = vmatpush1.msra.mxu0 0.0
        %738 = vmatprep.subr.mxu0 0.0
        %739 = vmatpush1.msra.mxu0 0.0
        %740 = vmatprep.subr.mxu0 0.0
        %741 = vmatpush1.msra.mxu0 0.0
        %742 = vmatprep.subr.mxu0 0.0
        %743 = vmatpush1.msra.mxu0 0.0
        %744 = vmatprep.subr.mxu0 0.0
        %745 = vmatpush1.msra.mxu0 0.0
        %746 = vmatprep.subr.mxu0 0.0
        %747 = vmatpush1.msra.mxu0 0.0
        %748 = vmatprep.subr.mxu0 0.0
        %749 = vmatpush1.msra.mxu0 0.0
        %750 = vmatprep.subr.mxu0 0.0
        %751 = vmatpush1.msra.mxu0 0.0
        %752 = vmatprep.subr.mxu0 0.0
        %753 = vmatpush1.msra.mxu0 0.0
        %754 = vmatprep.subr.mxu0 0.0
        %755 = vmatpush1.msra.mxu0 0.0
        %756 = vmatprep.subr.mxu0 0.0
        %757 = vmatpush1.msra.mxu0 0.0
        %758 = vmatprep.subr.mxu0 0.0
        %759 = vmatpush1.msra.mxu0 0.0
        %760 = vmatprep.subr.mxu0 0.0
        %761 = vmatpush1.msra.mxu0 0.0
        %762 = vmatprep.subr.mxu0 0.0
        %763 = vmatpush1.msra.mxu0 0.0
        %764 = vmatprep.subr.mxu0 0.0
        %765 = vmatpush1.msra.mxu0 0.0
        %766 = vmatprep.subr.mxu0 0.0
        %767 = vmatpush1.msra.mxu0 0.0
        %768 = vmatprep.subr.mxu0 0.0
        %769 = vmatpush1.msra.mxu0 0.0
        %770 = vmatprep.subr.mxu0 0.0
        %771 = vmatpush1.msra.mxu0 0.0
        %772 = vmatprep.subr.mxu0 0.0
        %773 = vmatpush1.msra.mxu0 0.0
        %774 = vmatprep.subr.mxu0 0.0
        %775 = vmatpush1.msra.mxu0 0.0
        %776 = vmatprep.subr.mxu0 0.0
        %777 = vmatpush1.msra.mxu0 0.0
        %778 = vmatprep.subr.mxu0 0.0
        %779 = vmatpush1.msra.mxu0 0.0
        %780 = vmatprep.subr.mxu0 0.0
        %781 = vmatpush1.msra.mxu0 0.0
        %782 = vmatprep.subr.mxu0 0.0
        %783 = vmatpush1.msra.mxu0 0.0
        %784 = vmatprep.subr.mxu0 0.0
        %785 = vmatpush1.msra.mxu0 0.0
        %786 = vmatprep.subr.mxu0 0.0
        %787 = vmatpush1.msra.mxu0 0.0
        %788 = vmatprep.subr.mxu0 0.0
        %789 = vmatpush1.msra.mxu0 0.0
        %790 = vmatprep.mubr.f32.mxu0 0.0
        %791 = vmatmul.mubr.f32.gmra.mrb[0].mxu0 %v724
        %v792 = vpop.f32.mrb[0].mxu0
        %v793 = vadd.f32 0.0, %v792
        %v794 = vpop.f32.mrb[0].mxu0
        %795 = vdwg.mxu0
        %796 = vrot.lane.b32.xlu0 %v461, 96
        %v797 = vpop.permute.xlu0 %796
        %798 = vrot.lane.b32.xlu0 %v461, 32
        %v799 = vpop.permute.xlu0 %798
        %v800 = vsel %vm468, %v797, 0
        %v802 = vsel %vm468, %v799, 0
        %804 = vmatprep.subr.mxu0 0.0
        %805 = vmatpush1.xpose.msra.mxu0 %v802
        %806 = vmatprep.subr.mxu0 0.0
        %807 = vmatpush1.xpose.msra.mxu0 0.0
        %808 = vmatprep.subr.mxu0 0.0
        %809 = vmatpush1.xpose.msra.mxu0 0.0
        %810 = vmatprep.subr.mxu0 0.0
        %811 = vmatpush1.xpose.msra.mxu0 0.0
        %812 = vmatprep.subr.mxu0 0.0
        %813 = vmatpush1.xpose.msra.mxu0 0.0
        %814 = vmatprep.subr.mxu0 0.0
        %815 = vmatpush1.xpose.msra.mxu0 0.0
        %816 = vmatprep.subr.mxu0 0.0
        %817 = vmatpush1.xpose.msra.mxu0 0.0
        %818 = vmatprep.subr.mxu0 0.0
        %819 = vmatpush1.xpose.msra.mxu0 0.0
        %820 = vmatprep.subr.mxu0 0.0
        %821 = vmatpush1.xpose.msra.mxu0 0.0
        %822 = vmatprep.subr.mxu0 0.0
        %823 = vmatpush1.xpose.msra.mxu0 0.0
        %824 = vmatprep.subr.mxu0 0.0
        %825 = vmatpush1.xpose.msra.mxu0 0.0
        %826 = vmatprep.subr.mxu0 0.0
        %827 = vmatpush1.xpose.msra.mxu0 0.0
        %828 = vmatprep.subr.mxu0 0.0
        %829 = vmatpush1.xpose.msra.mxu0 0.0
        %830 = vmatprep.subr.mxu0 0.0
        %831 = vmatpush1.xpose.msra.mxu0 0.0
        %832 = vmatprep.subr.mxu0 0.0
        %833 = vmatpush1.xpose.msra.mxu0 0.0
        %834 = vmatprep.subr.mxu0 0.0
        %835 = vmatpush1.xpose.msra.mxu0 0.0
        %836 = vmatprep.subr.mxu0 0.0
        %837 = vmatpush1.xpose.msra.mxu0 0.0
        %838 = vmatprep.subr.mxu0 0.0
        %839 = vmatpush1.xpose.msra.mxu0 0.0
        %840 = vmatprep.subr.mxu0 0.0
        %841 = vmatpush1.xpose.msra.mxu0 0.0
        %842 = vmatprep.subr.mxu0 0.0
        %843 = vmatpush1.xpose.msra.mxu0 0.0
        %844 = vmatprep.subr.mxu0 0.0
        %845 = vmatpush1.xpose.msra.mxu0 0.0
        %846 = vmatprep.subr.mxu0 0.0
        %847 = vmatpush1.xpose.msra.mxu0 0.0
        %848 = vmatprep.subr.mxu0 0.0
        %849 = vmatpush1.xpose.msra.mxu0 0.0
        %850 = vmatprep.subr.mxu0 0.0
        %851 = vmatpush1.xpose.msra.mxu0 0.0
        %852 = vmatprep.subr.mxu0 0.0
        %853 = vmatpush1.xpose.msra.mxu0 0.0
        %854 = vmatprep.subr.mxu0 0.0
        %855 = vmatpush1.xpose.msra.mxu0 0.0
        %856 = vmatprep.subr.mxu0 0.0
        %857 = vmatpush1.xpose.msra.mxu0 0.0
        %858 = vmatprep.subr.mxu0 0.0
        %859 = vmatpush1.xpose.msra.mxu0 0.0
        %860 = vmatprep.subr.mxu0 0.0
        %861 = vmatpush1.xpose.msra.mxu0 0.0
        %862 = vmatprep.subr.mxu0 0.0
        %863 = vmatpush1.xpose.msra.mxu0 0.0
        %864 = vmatprep.subr.mxu0 0.0
        %865 = vmatpush1.xpose.msra.mxu0 0.0
        %866 = vmatprep.subr.mxu0 0.0
        %867 = vmatpush1.xpose.msra.mxu0 0.0
        %868 = vmatprep.mubr.f32.mxu0 0.0
        %869 = vmatmul.mubr.f32.gmra.mrb[0].mxu0 %v800
        %v870 = vpop.f32.mrb[0].mxu0
        %v871 = vadd.f32 0.0, %v870
        %v872 = vpop.f32.mrb[0].mxu0
        %873 = vdwg.mxu0
        %v874 = vmul.f32 %v871, 0.25
        %v875 = vsel %vm544, %v874, -inf
        %876 = vmax.xlane.f32.xlu0 %v875
        %v877 = vpop.xlane.xlu0 %876
        %v878 = vsub.f32 %v874, %v877
        %v879 = vmul.f32 %v878, 1.442695
        %v880 = vpow.pop %v879
        %v881 = vsel %vm544, %v880, 0.0
        %882 = vadd.xlane.f32.xlu0 %v881
        %v883 = vpop.xlane.xlu0 %882
        %v884 = vrcp.pop %v883
        %v885 = vmul.f32 %v880, %v884
        %886 = vrot.lane.b32.xlu0 %v463, 96
        %v887 = vpop.permute.xlu0 %886
        %v890 = vsel %vm544, %v885, 0
        %892 = vmatprep.subr.mxu0 0.0
        %893 = vmatpush1.msra.mxu0 %v887
        %894 = vmatprep.subr.mxu0 0.0
        %895 = vmatpush1.msra.mxu0 0.0
        %896 = vmatprep.subr.mxu0 0.0
        %897 = vmatpush1.msra.mxu0 0.0
        %898 = vmatprep.subr.mxu0 0.0
        %899 = vmatpush1.msra.mxu0 0.0
        %900 = vmatprep.subr.mxu0 0.0
        %901 = vmatpush1.msra.mxu0 0.0
        %902 = vmatprep.subr.mxu0 0.0
        %903 = vmatpush1.msra.mxu0 0.0
        %904 = vmatprep.subr.mxu0 0.0
        %905 = vmatpush1.msra.mxu0 0.0
        %906 = vmatprep.subr.mxu0 0.0
        %907 = vmatpush1.msra.mxu0 0.0
        %908 = vmatprep.subr.mxu0 0.0
        %909 = vmatpush1.msra.mxu0 0.0
        %910 = vmatprep.subr.mxu0 0.0
        %911 = vmatpush1.msra.mxu0 0.0
        %912 = vmatprep.subr.mxu0 0.0
        %913 = vmatpush1.msra.mxu0 0.0
        %914 = vmatprep.subr.mxu0 0.0
        %915 = vmatpush1.msra.mxu0 0.0
        %916 = vmatprep.subr.mxu0 0.0
        %917 = vmatpush1.msra.mxu0 0.0
        %918 = vmatprep.subr.mxu0 0.0
        %919 = vmatpush1.msra.mxu0 0.0
        %920 = vmatprep.subr.mxu0 0.0
        %921 = vmatpush1.msra.mxu0 0.0
        %922 = vmatprep.subr.mxu0 0.0
        %923 = vmatpush1.msra.mxu0 0.0
        %924 = vmatprep.subr.mxu0 0.0
        %925 = vmatpush1.msra.mxu0 0.0
        %926 = vmatprep.subr.mxu0 0.0
        %927 = vmatpush1.msra.mxu0 0.0
        %928 = vmatprep.subr.mxu0 0.0
        %929 = vmatpush1.msra.mxu0 0.0
        %930 = vmatprep.subr.mxu0 0.0
        %931 = vmatpush1.msra.mxu0 0.0
        %932 = vmatprep.subr.mxu0 0.0
        %933 = vmatpush1.msra.mxu0 0.0
        %934 = vmatprep.subr.mxu0 0.0
        %935 = vmatpush1.msra.mxu0 0.0
        %936 = vmatprep.subr.mxu0 0.0
        %937 = vmatpush1.msra.mxu0 0.0
        %938 = vmatprep.subr.mxu0 0.0
        %939 = vmatpush1.msra.mxu0 0.0
        %940 = vmatprep.subr.mxu0 0.0
        %941 = vmatpush1.msra.mxu0 0.0
        %942 = vmatprep.subr.mxu0 0.0
        %943 = vmatpush1.msra.mxu0 0.0
        %944 = vmatprep.subr.mxu0 0.0
        %945 = vmatpush1.msra.mxu0 0.0
        %946 = vmatprep.subr.mxu0 0.0
        %947 = vmatpush1.msra.mxu0 0.0
        %948 = vmatprep.subr.mxu0 0.0
        %949 = vmatpush1.msra.mxu0 0.0
        %950 = vmatprep.subr.mxu0 0.0
        %951 = vmatpush1.msra.mxu0 0.0
        %952 = vmatprep.subr.mxu0 0.0
        %953 = vmatpush1.msra.mxu0 0.0
        %954 = vmatprep.subr.mxu0 0.0
        %955 = vmatpush1.msra.mxu0 0.0
        %956 = vmatprep.mubr.f32.mxu0 0.0
        %957 = vmatmul.mubr.f32.gmra.mrb[0].mxu0 %v890
        %v958 = vpop.f32.mrb[0].mxu0
        %v959 = vadd.f32 0.0, %v958
        %v960 = vpop.f32.mrb[0].mxu0
        %961 = vdwg.mxu0
        %962 = vrot.lane.b32.xlu0 %v461, 80
        %v963 = vpop.permute.xlu0 %962
        %964 = vrot.lane.b32.xlu0 %v461, 16
        %v965 = vpop.permute.xlu0 %964
        %v966 = vsel %vm468, %v963, 0
        %v968 = vsel %vm468, %v965, 0
        %970 = vmatprep.subr.mxu0 0.0
        %971 = vmatpush1.xpose.msra.mxu0 %v968
        %972 = vmatprep.subr.mxu0 0.0
        %973 = vmatpush1.xpose.msra.mxu0 0.0
        %974 = vmatprep.subr.mxu0 0.0
        %975 = vmatpush1.xpose.msra.mxu0 0.0
        %976 = vmatprep.subr.mxu0 0.0
        %977 = vmatpush1.xpose.msra.mxu0 0.0
        %978 = vmatprep.subr.mxu0 0.0
        %979 = vmatpush1.xpose.msra.mxu0 0.0
        %980 = vmatprep.subr.mxu0 0.0
        %981 = vmatpush1.xpose.msra.mxu0 0.0
        %982 = vmatprep.subr.mxu0 0.0
        %983 = vmatpush1.xpose.msra.mxu0 0.0
        %984 = vmatprep.subr.mxu0 0.0
        %985 = vmatpush1.xpose.msra.mxu0 0.0
        %986 = vmatprep.subr.mxu0 0.0
        %987 = vmatpush1.xpose.msra.mxu0 0.0
        %988 = vmatprep.subr.mxu0 0.0
        %989 = vmatpush1.xpose.msra.mxu0 0.0
        %990 = vmatprep.subr.mxu0 0.0
        %991 = vmatpush1.xpose.msra.mxu0 0.0
        %992 = vmatprep.subr.mxu0 0.0
        %993 = vmatpush1.xpose.msra.mxu0 0.0
        %994 = vmatprep.subr.mxu0 0.0
        %995 = vmatpush1.xpose.msra.mxu0 0.0
        %996 = vmatprep.subr.mxu0 0.0
        %997 = vmatpush1.xpose.msra.mxu0 0.0
        %998 = vmatprep.subr.mxu0 0.0
        %999 = vmatpush1.xpose.msra.mxu0 0.0
        %1000 = vmatprep.subr.mxu0 0.0
        %1001 = vmatpush1.xpose.msra.mxu0 0.0
        %1002 = vmatprep.subr.mxu0 0.0
        %1003 = vmatpush1.xpose.msra.mxu0 0.0
        %1004 = vmatprep.subr.mxu0 0.0
        %1005 = vmatpush1.xpose.msra.mxu0 0.0
        %1006 = vmatprep.subr.mxu0 0.0
        %1007 = vmatpush1.xpose.msra.mxu0 0.0
        %1008 = vmatprep.subr.mxu0 0.0
        %1009 = vmatpush1.xpose.msra.mxu0 0.0
        %1010 = vmatprep.subr.mxu0 0.0
        %1011 = vmatpush1.xpose.msra.mxu0 0.0
        %1012 = vmatprep.subr.mxu0 0.0
        %1013 = vmatpush1.xpose.msra.mxu0 0.0
        %1014 = vmatprep.subr.mxu0 0.0
        %1015 = vmatpush1.xpose.msra.mxu0 0.0
        %1016 = vmatprep.subr.mxu0 0.0
        %1017 = vmatpush1.xpose.msra.mxu0 0.0
        %1018 = vmatprep.subr.mxu0 0.0
        %1019 = vmatpush1.xpose.msra.mxu0 0.0
        %1020 = vmatprep.subr.mxu0 0.0
        %1021 = vmatpush1.xpose.msra.mxu0 0.0
        %1022 = vmatprep.subr.mxu0 0.0
        %1023 = vmatpush1.xpose.msra.mxu0 0.0
        %1024 = vmatprep.subr.mxu0 0.0
        %1025 = vmatpush1.xpose.msra.mxu0 0.0
        %1026 = vmatprep.subr.mxu0 0.0
        %1027 = vmatpush1.xpose.msra.mxu0 0.0
        %1028 = vmatprep.subr.mxu0 0.0
        %1029 = vmatpush1.xpose.msra.mxu0 0.0
        %1030 = vmatprep.subr.mxu0 0.0
        %1031 = vmatpush1.xpose.msra.mxu0 0.0
        %1032 = vmatprep.subr.mxu0 0.0
        %1033 = vmatpush1.xpose.msra.mxu0 0.0
        %1034 = vmatprep.mubr.f32.mxu0 0.0
        %1035 = vmatmul.mubr.f32.gmra.mrb[0].mxu0 %v966
        %v1036 = vpop.f32.mrb[0].mxu0
        %v1037 = vadd.f32 0.0, %v1036
        %v1038 = vpop.f32.mrb[0].mxu0
        %1039 = vdwg.mxu0
        %v1040 = vmul.f32 %v1037, 0.25
        %v1041 = vsel %vm544, %v1040, -inf
        %1042 = vmax.xlane.f32.xlu0 %v1041
        %v1043 = vpop.xlane.xlu0 %1042
        %v1044 = vsub.f32 %v1040, %v1043
        %v1045 = vmul.f32 %v1044, 1.442695
        %v1046 = vpow.pop %v1045
        %v1047 = vsel %vm544, %v1046, 0.0
        %1048 = vadd.xlane.f32.xlu0 %v1047
        %v1049 = vpop.xlane.xlu0 %1048
        %v1050 = vrcp.pop %v1049
        %v1051 = vmul.f32 %v1046, %v1050
        %1052 = vrot.lane.b32.xlu0 %v463, 80
        %v1053 = vpop.permute.xlu0 %1052
        %v1056 = vsel %vm544, %v1051, 0
        %1058 = vmatprep.subr.mxu0 0.0
        %1059 = vmatpush1.msra.mxu0 %v1053
        %1060 = vmatprep.subr.mxu0 0.0
        %1061 = vmatpush1.msra.mxu0 0.0
        %1062 = vmatprep.subr.mxu0 0.0
        %1063 = vmatpush1.msra.mxu0 0.0
        %1064 = vmatprep.subr.mxu0 0.0
        %1065 = vmatpush1.msra.mxu0 0.0
        %1066 = vmatprep.subr.mxu0 0.0
        %1067 = vmatpush1.msra.mxu0 0.0
        %1068 = vmatprep.subr.mxu0 0.0
        %1069 = vmatpush1.msra.mxu0 0.0
        %1070 = vmatprep.subr.mxu0 0.0
        %1071 = vmatpush1.msra.mxu0 0.0
        %1072 = vmatprep.subr.mxu0 0.0
        %1073 = vmatpush1.msra.mxu0 0.0
        %1074 = vmatprep.subr.mxu0 0.0
        %1075 = vmatpush1.msra.mxu0 0.0
        %1076 = vmatprep.subr.mxu0 0.0
        %1077 = vmatpush1.msra.mxu0 0.0
        %1078 = vmatprep.subr.mxu0 0.0
        %1079 = vmatpush1.msra.mxu0 0.0
        %1080 = vmatprep.subr.mxu0 0.0
        %1081 = vmatpush1.msra.mxu0 0.0
        %1082 = vmatprep.subr.mxu0 0.0
        %1083 = vmatpush1.msra.mxu0 0.0
        %1084 = vmatprep.subr.mxu0 0.0
        %1085 = vmatpush1.msra.mxu0 0.0
        %1086 = vmatprep.subr.mxu0 0.0
        %1087 = vmatpush1.msra.mxu0 0.0
        %1088 = vmatprep.subr.mxu0 0.0
        %1089 = vmatpush1.msra.mxu0 0.0
        %1090 = vmatprep.subr.mxu0 0.0
        %1091 = vmatpush1.msra.mxu0 0.0
        %1092 = vmatprep.subr.mxu0 0.0
        %1093 = vmatpush1.msra.mxu0 0.0
        %1094 = vmatprep.subr.mxu0 0.0
        %1095 = vmatpush1.msra.mxu0 0.0
        %1096 = vmatprep.subr.mxu0 0.0
        %1097 = vmatpush1.msra.mxu0 0.0
        %1098 = vmatprep.subr.mxu0 0.0
        %1099 = vmatpush1.msra.mxu0 0.0
        %1100 = vmatprep.subr.mxu0 0.0
        %1101 = vmatpush1.msra.mxu0 0.0
        %1102 = vmatprep.subr.mxu0 0.0
        %1103 = vmatpush1.msra.mxu0 0.0
        %1104 = vmatprep.subr.mxu0 0.0
        %1105 = vmatpush1.msra.mxu0 0.0
        %1106 = vmatprep.subr.mxu0 0.0
        %1107 = vmatpush1.msra.mxu0 0.0
        %1108 = vmatprep.subr.mxu0 0.0
        %1109 = vmatpush1.msra.mxu0 0.0
        %1110 = vmatprep.subr.mxu0 0.0
        %1111 = vmatpush1.msra.mxu0 0.0
        %1112 = vmatprep.subr.mxu0 0.0
        %1113 = vmatpush1.msra.mxu0 0.0
        %1114 = vmatprep.subr.mxu0 0.0
        %1115 = vmatpush1.msra.mxu0 0.0
        %1116 = vmatprep.subr.mxu0 0.0
        %1117 = vmatpush1.msra.mxu0 0.0
        %1118 = vmatprep.subr.mxu0 0.0
        %1119 = vmatpush1.msra.mxu0 0.0
        %1120 = vmatprep.subr.mxu0 0.0
        %1121 = vmatpush1.msra.mxu0 0.0
        %1122 = vmatprep.mubr.f32.mxu0 0.0
        %1123 = vmatmul.mubr.f32.gmra.mrb[0].mxu0 %v1056
        %v1124 = vpop.f32.mrb[0].mxu0
        %v1125 = vadd.f32 0.0, %v1124
        %v1126 = vpop.f32.mrb[0].mxu0
        %1127 = vdwg.mxu0
        %1129 = vrot.lane.b32.xlu0 %v793, 16
        %v1130 = vpop.permute.xlu0 %1129
        %1133 = vrot.lane.b32.xlu0 %v959, 32
        %v1134 = vpop.permute.xlu0 %1133
        %1137 = vrot.lane.b32.xlu0 %v1125, 48
        %v1138 = vpop.permute.xlu0 %1137
        %v1140 = vsel %vm468, %v626, %v1130
        %vm1141 = vcmask 261120
        %v1142 = vsel %vm1141, %v1140, %v1134
        %vm1143 = vcmask 392192
        %v1144 = vsel %vm1143, %v1142, %v1138
        %v1145 = vld [vmem:[#allocation8] sm:$0xff]
        %v1146 = vld [vmem:[#allocation8 + $0x8] sm:$0xff]
        %v1147 = vld [vmem:[#allocation8 + $0x10] sm:$0xff]
        %v1148 = vld [vmem:[#allocation8 + $0x18] sm:$0xff]
        %v1149 = vld [vmem:[#allocation8 + $0x20] sm:$0xff]
        %v1150 = vld [vmem:[#allocation8 + $0x28] sm:$0xff]
        %v1151 = vld [vmem:[#allocation8 + $0x30] sm:$0xff]
        %v1152 = vld [vmem:[#allocation8 + $0x38] sm:$0xff]
        %v1153 = vld [vmem:[%s5] sm:$0x1]
        %v1154 = vlaneseq
        %v1155 = vshrl.u32 %v1154, 7
        %v1156 = vsub.s32 0, %v1155
        %v1157 = vrot.slane %v1153, %v1156
        %v1159 = vsel %vm390, %v1144, 0
        %1161 = vmatprep.subr.mxu0 0.0
        %1162 = vmatpush1.msra.mxu0 %v1145
        %1163 = vmatprep.subr.mxu0 0.0
        %1164 = vmatpush1.msra.mxu0 %v1146
        %1165 = vmatprep.subr.mxu0 0.0
        %1166 = vmatpush1.msra.mxu0 %v1147
        %1167 = vmatprep.subr.mxu0 0.0
        %1168 = vmatpush1.msra.mxu0 %v1148
        %1169 = vmatprep.subr.mxu0 0.0
        %1170 = vmatpush1.msra.mxu0 %v1149
        %1171 = vmatprep.subr.mxu0 0.0
        %1172 = vmatpush1.msra.mxu0 %v1150
        %1173 = vmatprep.subr.mxu0 0.0
        %1174 = vmatpush1.msra.mxu0 %v1151
        %1175 = vmatprep.subr.mxu0 0.0
        %1176 = vmatpush1.msra.mxu0 %v1152
        %1177 = vmatprep.subr.mxu0 0.0
        %1178 = vmatpush1.msra.mxu0 0.0
        %1179 = vmatprep.subr.mxu0 0.0
        %1180 = vmatpush1.msra.mxu0 0.0
        %1181 = vmatprep.subr.mxu0 0.0
        %1182 = vmatpush1.msra.mxu0 0.0
        %1183 = vmatprep.subr.mxu0 0.0
        %1184 = vmatpush1.msra.mxu0 0.0
        %1185 = vmatprep.subr.mxu0 0.0
        %1186 = vmatpush1.msra.mxu0 0.0
        %1187 = vmatprep.subr.mxu0 0.0
        %1188 = vmatpush1.msra.mxu0 0.0
        %1189 = vmatprep.subr.mxu0 0.0
        %1190 = vmatpush1.msra.mxu0 0.0
        %1191 = vmatprep.subr.mxu0 0.0
        %1192 = vmatpush1.msra.mxu0 0.0
        %1193 = vmatprep.subr.mxu0 0.0
        %1194 = vmatpush1.msra.mxu0 0.0
        %1195 = vmatprep.subr.mxu0 0.0
        %1196 = vmatpush1.msra.mxu0 0.0
        %1197 = vmatprep.subr.mxu0 0.0
        %1198 = vmatpush1.msra.mxu0 0.0
        %1199 = vmatprep.subr.mxu0 0.0
        %1200 = vmatpush1.msra.mxu0 0.0
        %1201 = vmatprep.subr.mxu0 0.0
        %1202 = vmatpush1.msra.mxu0 0.0
        %1203 = vmatprep.subr.mxu0 0.0
        %1204 = vmatpush1.msra.mxu0 0.0
        %1205 = vmatprep.subr.mxu0 0.0
        %1206 = vmatpush1.msra.mxu0 0.0
        %1207 = vmatprep.subr.mxu0 0.0
        %1208 = vmatpush1.msra.mxu0 0.0
        %1209 = vmatprep.subr.mxu0 0.0
        %1210 = vmatpush1.msra.mxu0 0.0
        %1211 = vmatprep.subr.mxu0 0.0
        %1212 = vmatpush1.msra.mxu0 0.0
        %1213 = vmatprep.subr.mxu0 0.0
        %1214 = vmatpush1.msra.mxu0 0.0
        %1215 = vmatprep.subr.mxu0 0.0
        %1216 = vmatpush1.msra.mxu0 0.0
        %1217 = vmatprep.subr.mxu0 0.0
        %1218 = vmatpush1.msra.mxu0 0.0
        %1219 = vmatprep.subr.mxu0 0.0
        %1220 = vmatpush1.msra.mxu0 0.0
        %1221 = vmatprep.subr.mxu0 0.0
        %1222 = vmatpush1.msra.mxu0 0.0
        %1223 = vmatprep.subr.mxu0 0.0
        %1224 = vmatpush1.msra.mxu0 0.0
        %1225 = vmatprep.mubr.f32.mxu0 0.0
        %1226 = vmatmul.mubr.f32.gmra.mrb[0].mxu0 %v1159
        %v1227 = vpop.f32.mrb[0].mxu0
        %v1228 = vadd.f32 %v1157, %v1227
        %v1229 = vpop.f32.mrb[0].mxu0
        %1230 = vdwg.mxu0
        %v1231 = vadd.f32 %v1228, %v360
        %v1232 = vld [vmem:[%s6] sm:$0x1]
        %v1233 = vld [vmem:[%s6 + $0x1] sm:$0x1]
        %v1234 = vsel %vm390, %v1231, 0.0
        %1235 = vadd.xlane.f32.xlu0 %v1234
        %v1236 = vpop.xlane.xlu0 %1235
        %v1237 = vrcp.pop 64.0
        %v1238 = vmul.f32 %v1236, %v1237
        %v1239 = vsub.f32 %v1231, %v1238
        %v1240 = vmul.f32 %v1239, %v1239
        %v1241 = vsel %vm390, %v1240, 0.0
        %1242 = vadd.xlane.f32.xlu0 %v1241
        %v1243 = vpop.xlane.xlu0 %1242
        %v1244 = vmul.f32 %v1243, %v1237
        %v1245 = vadd.f32 %v1244, 1e-05
        %v1246 = vrsqrt.pop %v1245
        %v1247 = vmul.f32 %v1239, %v1246
        %v1248 = vlaneseq
        %v1249 = vshrl.u32 %v1248, 7
        %v1250 = vsub.s32 0, %v1249
        %v1251 = vrot.slane %v1232, %v1250
        %v1252 = vmul.f32 %v1247, %v1251
        %v1253 = vlaneseq
        %v1254 = vshrl.u32 %v1253, 7
        %v1255 = vsub.s32 0, %v1254
        %v1256 = vrot.slane %v1233, %v1255
        %v1257 = vadd.f32 %v1252, %v1256
        %s1258 = scalar_lea.vmem [#allocation7], 128
        %v1259 = vld [vmem:[%s1258] sm:$0xff]
        %v1260 = vld [vmem:[%s1258 + $0x8] sm:$0xff]
        %v1261 = vld [vmem:[%s1258 + $0x10] sm:$0xff]
        %v1262 = vld [vmem:[%s1258 + $0x18] sm:$0xff]
        %v1263 = vld [vmem:[%s1258 + $0x20] sm:$0xff]
        %v1264 = vld [vmem:[%s1258 + $0x28] sm:$0xff]
        %v1265 = vld [vmem:[%s1258 + $0x30] sm:$0xff]
        %v1266 = vld [vmem:[%s1258 + $0x38] sm:$0xff]
        %v1267 = vld [vmem:[%s1258 + $0x40] sm:$0xff]
        %v1268 = vld [vmem:[%s1258 + $0x48] sm:$0xff]
        %v1269 = vld [vmem:[%s1258 + $0x50] sm:$0xff]
        %v1270 = vld [vmem:[%s1258 + $0x58] sm:$0xff]
        %v1271 = vld [vmem:[%s1258 + $0x60] sm:$0xff]
        %v1272 = vld [vmem:[%s1258 + $0x68] sm:$0xff]
        %v1273 = vld [vmem:[%s1258 + $0x70] sm:$0xff]
        %v1274 = vld [vmem:[%s1258 + $0x78] sm:$0xff]
        %s1275 = scalar_lea.vmem %s3, 1
        %v1276 = vld [vmem:[%s1275] ss:$2 sm:$0x3]
        %v1278 = vlaneseq
        %v1279 = vshrl.u32 %v1278, 7
        %v1280 = vsub.s32 0, %v1279
        %v1281 = vrot.slane %v1276, %v1280
        %v1282 = vlaneseq
        %v1283 = vshrl.u32 %v1282, 7
        %v1284 = vsub.s32 1, %v1283
        %v1285 = vrot.slane %v1276, %v1284
        %v1289 = vsel %vm390, %v1257, 0
        %1291 = vmatprep.subr.mxu0 %v1260
        %1292 = vmatpush1.msra.mxu0 %v1259
        %1293 = vmatprep.subr.mxu0 %v1262
        %1294 = vmatpush1.msra.mxu0 %v1261
        %1295 = vmatprep.subr.mxu0 %v1264
        %1296 = vmatpush1.msra.mxu0 %v1263
        %1297 = vmatprep.subr.mxu0 %v1266
        %1298 = vmatpush1.msra.mxu0 %v1265
        %1299 = vmatprep.subr.mxu0 %v1268
        %1300 = vmatpush1.msra.mxu0 %v1267
        %1301 = vmatprep.subr.mxu0 %v1270
        %1302 = vmatpush1.msra.mxu0 %v1269
        %1303 = vmatprep.subr.mxu0 %v1272
        %1304 = vmatpush1.msra.mxu0 %v1271
        %1305 = vmatprep.subr.mxu0 %v1274
        %1306 = vmatpush1.msra.mxu0 %v1273
        %1307 = vmatprep.subr.mxu0 0.0
        %1308 = vmatpush1.msra.mxu0 0.0
        %1309 = vmatprep.subr.mxu0 0.0
        %1310 = vmatpush1.msra.mxu0 0.0
        %1311 = vmatprep.subr.mxu0 0.0
        %1312 = vmatpush1.msra.mxu0 0.0
        %1313 = vmatprep.subr.mxu0 0.0
        %1314 = vmatpush1.msra.mxu0 0.0
        %1315 = vmatprep.subr.mxu0 0.0
        %1316 = vmatpush1.msra.mxu0 0.0
        %1317 = vmatprep.subr.mxu0 0.0
        %1318 = vmatpush1.msra.mxu0 0.0
        %1319 = vmatprep.subr.mxu0 0.0
        %1320 = vmatpush1.msra.mxu0 0.0
        %1321 = vmatprep.subr.mxu0 0.0
        %1322 = vmatpush1.msra.mxu0 0.0
        %1323 = vmatprep.subr.mxu0 0.0
        %1324 = vmatpush1.msra.mxu0 0.0
        %1325 = vmatprep.subr.mxu0 0.0
        %1326 = vmatpush1.msra.mxu0 0.0
        %1327 = vmatprep.subr.mxu0 0.0
        %1328 = vmatpush1.msra.mxu0 0.0
        %1329 = vmatprep.subr.mxu0 0.0
        %1330 = vmatpush1.msra.mxu0 0.0
        %1331 = vmatprep.subr.mxu0 0.0
        %1332 = vmatpush1.msra.mxu0 0.0
        %1333 = vmatprep.subr.mxu0 0.0
        %1334 = vmatpush1.msra.mxu0 0.0
        %1335 = vmatprep.subr.mxu0 0.0
        %1336 = vmatpush1.msra.mxu0 0.0
        %1337 = vmatprep.subr.mxu0 0.0
        %1338 = vmatpush1.msra.mxu0 0.0
        %1339 = vmatprep.subr.mxu0 0.0
        %1340 = vmatpush1.msra.mxu0 0.0
        %1341 = vmatprep.subr.mxu0 0.0
        %1342 = vmatpush1.msra.mxu0 0.0
        %1343 = vmatprep.subr.mxu0 0.0
        %1344 = vmatpush1.msra.mxu0 0.0
        %1345 = vmatprep.subr.mxu0 0.0
        %1346 = vmatpush1.msra.mxu0 0.0
        %1347 = vmatprep.subr.mxu0 0.0
        %1348 = vmatpush1.msra.mxu0 0.0
        %1349 = vmatprep.subr.mxu0 0.0
        %1350 = vmatpush1.msra.mxu0 0.0
        %1351 = vmatprep.subr.mxu0 0.0
        %1352 = vmatpush1.msra.mxu0 0.0
        %1353 = vmatprep.subr.mxu0 0.0
        %1354 = vmatpush1.msra.mxu0 0.0
        %1355 = vmatprep.mubr.f32.mxu0 0.0
        %1356 = vmatmul.mubr.f32.gmra.mrb[0].mxu0 %v1289
        %v1357 = vpop.f32.mrb[0].mxu0
        %v1358 = vadd.f32 %v1281, %v1357
        %v1359 = vpop.f32.mrb[0].mxu0
        %1360 = vdwg.mxu0
        %v1362 = vsel %vm390, %v361, 0
        %1364 = vmatprep.subr.mxu0 %v1260
        %1365 = vmatpush1.msra.mxu0 %v1259
        %1366 = vmatprep.subr.mxu0 %v1262
        %1367 = vmatpush1.msra.mxu0 %v1261
        %1368 = vmatprep.subr.mxu0 %v1264
        %1369 = vmatpush1.msra.mxu0 %v1263
        %1370 = vmatprep.subr.mxu0 %v1266
        %1371 = vmatpush1.msra.mxu0 %v1265
        %1372 = vmatprep.subr.mxu0 %v1268
        %1373 = vmatpush1.msra.mxu0 %v1267
        %1374 = vmatprep.subr.mxu0 %v1270
        %1375 = vmatpush1.msra.mxu0 %v1269
        %1376 = vmatprep.subr.mxu0 %v1272
        %1377 = vmatpush1.msra.mxu0 %v1271
        %1378 = vmatprep.subr.mxu0 %v1274
        %1379 = vmatpush1.msra.mxu0 %v1273
        %1380 = vmatprep.subr.mxu0 0.0
        %1381 = vmatpush1.msra.mxu0 0.0
        %1382 = vmatprep.subr.mxu0 0.0
        %1383 = vmatpush1.msra.mxu0 0.0
        %1384 = vmatprep.subr.mxu0 0.0
        %1385 = vmatpush1.msra.mxu0 0.0
        %1386 = vmatprep.subr.mxu0 0.0
        %1387 = vmatpush1.msra.mxu0 0.0
        %1388 = vmatprep.subr.mxu0 0.0
        %1389 = vmatpush1.msra.mxu0 0.0
        %1390 = vmatprep.subr.mxu0 0.0
        %1391 = vmatpush1.msra.mxu0 0.0
        %1392 = vmatprep.subr.mxu0 0.0
        %1393 = vmatpush1.msra.mxu0 0.0
        %1394 = vmatprep.subr.mxu0 0.0
        %1395 = vmatpush1.msra.mxu0 0.0
        %1396 = vmatprep.subr.mxu0 0.0
        %1397 = vmatpush1.msra.mxu0 0.0
        %1398 = vmatprep.subr.mxu0 0.0
        %1399 = vmatpush1.msra.mxu0 0.0
        %1400 = vmatprep.subr.mxu0 0.0
        %1401 = vmatpush1.msra.mxu0 0.0
        %1402 = vmatprep.subr.mxu0 0.0
        %1403 = vmatpush1.msra.mxu0 0.0
        %1404 = vmatprep.subr.mxu0 0.0
        %1405 = vmatpush1.msra.mxu0 0.0
        %1406 = vmatprep.subr.mxu0 0.0
        %1407 = vmatpush1.msra.mxu0 0.0
        %1408 = vmatprep.subr.mxu0 0.0
        %1409 = vmatpush1.msra.mxu0 0.0
        %1410 = vmatprep.subr.mxu0 0.0
        %1411 = vmatpush1.msra.mxu0 0.0
        %1412 = vmatprep.subr.mxu0 0.0
        %1413 = vmatpush1.msra.mxu0 0.0
        %1414 = vmatprep.subr.mxu0 0.0
        %1415 = vmatpush1.msra.mxu0 0.0
        %1416 = vmatprep.subr.mxu0 0.0
        %1417 = vmatpush1.msra.mxu0 0.0
        %1418 = vmatprep.subr.mxu0 0.0
        %1419 = vmatpush1.msra.mxu0 0.0
        %1420 = vmatprep.subr.mxu0 0.0
        %1421 = vmatpush1.msra.mxu0 0.0
        %1422 = vmatprep.subr.mxu0 0.0
        %1423 = vmatpush1.msra.mxu0 0.0
        %1424 = vmatprep.subr.mxu0 0.0
        %1425 = vmatpush1.msra.mxu0 0.0
        %1426 = vmatprep.subr.mxu0 0.0
        %1427 = vmatpush1.msra.mxu0 0.0
        %1428 = vmatprep.mubr.f32.mxu0 0.0
        %1429 = vmatmul.mubr.f32.gmra.mrb[0].mxu0 %v1362
        %v1430 = vpop.f32.mrb[0].mxu0
        %v1431 = vadd.f32 %v1281, %v1430
        %v1432 = vpop.f32.mrb[0].mxu0
        %v1433 = vadd.f32 %v1285, %v1432
        %1434 = vdwg.mxu0
        %1436 = vrot.lane.b32.xlu0 %v1431, 64
        %v1437 = vpop.permute.xlu0 %1436
        %v1439 = vsel %vm468, %v1358, 0
        %v1441 = vsel %vm468, %v1437, 0
        %1443 = vmatprep.subr.mxu0 0.0
        %1444 = vmatpush1.xpose.msra.mxu0 %v1441
        %1445 = vmatprep.subr.mxu0 0.0
        %1446 = vmatpush1.xpose.msra.mxu0 0.0
        %1447 = vmatprep.subr.mxu0 0.0
        %1448 = vmatpush1.xpose.msra.mxu0 0.0
        %1449 = vmatprep.subr.mxu0 0.0
        %1450 = vmatpush1.xpose.msra.mxu0 0.0
        %1451 = vmatprep.subr.mxu0 0.0
        %1452 = vmatpush1.xpose.msra.mxu0 0.0
        %1453 = vmatprep.subr.mxu0 0.0
        %1454 = vmatpush1.xpose.msra.mxu0 0.0
        %1455 = vmatprep.subr.mxu0 0.0
        %1456 = vmatpush1.xpose.msra.mxu0 0.0
        %1457 = vmatprep.subr.mxu0 0.0
        %1458 = vmatpush1.xpose.msra.mxu0 0.0
        %1459 = vmatprep.subr.mxu0 0.0
        %1460 = vmatpush1.xpose.msra.mxu0 0.0
        %1461 = vmatprep.subr.mxu0 0.0
        %1462 = vmatpush1.xpose.msra.mxu0 0.0
        %1463 = vmatprep.subr.mxu0 0.0
        %1464 = vmatpush1.xpose.msra.mxu0 0.0
        %1465 = vmatprep.subr.mxu0 0.0
        %1466 = vmatpush1.xpose.msra.mxu0 0.0
        %1467 = vmatprep.subr.mxu0 0.0
        %1468 = vmatpush1.xpose.msra.mxu0 0.0
        %1469 = vmatprep.subr.mxu0 0.0
        %1470 = vmatpush1.xpose.msra.mxu0 0.0
        %1471 = vmatprep.subr.mxu0 0.0
        %1472 = vmatpush1.xpose.msra.mxu0 0.0
        %1473 = vmatprep.subr.mxu0 0.0
        %1474 = vmatpush1.xpose.msra.mxu0 0.0
        %1475 = vmatprep.subr.mxu0 0.0
        %1476 = vmatpush1.xpose.msra.mxu0 0.0
        %1477 = vmatprep.subr.mxu0 0.0
        %1478 = vmatpush1.xpose.msra.mxu0 0.0
        %1479 = vmatprep.subr.mxu0 0.0
        %1480 = vmatpush1.xpose.msra.mxu0 0.0
        %1481 = vmatprep.subr.mxu0 0.0
        %1482 = vmatpush1.xpose.msra.mxu0 0.0
        %1483 = vmatprep.subr.mxu0 0.0
        %1484 = vmatpush1.xpose.msra.mxu0 0.0
        %1485 = vmatprep.subr.mxu0 0.0
        %1486 = vmatpush1.xpose.msra.mxu0 0.0
        %1487 = vmatprep.subr.mxu0 0.0
        %1488 = vmatpush1.xpose.msra.mxu0 0.0
        %1489 = vmatprep.subr.mxu0 0.0
        %1490 = vmatpush1.xpose.msra.mxu0 0.0
        %1491 = vmatprep.subr.mxu0 0.0
        %1492 = vmatpush1.xpose.msra.mxu0 0.0
        %1493 = vmatprep.subr.mxu0 0.0
        %1494 = vmatpush1.xpose.msra.mxu0 0.0
        %1495 = vmatprep.subr.mxu0 0.0
        %1496 = vmatpush1.xpose.msra.mxu0 0.0
        %1497 = vmatprep.subr.mxu0 0.0
        %1498 = vmatpush1.xpose.msra.mxu0 0.0
        %1499 = vmatprep.subr.mxu0 0.0
        %1500 = vmatpush1.xpose.msra.mxu0 0.0
        %1501 = vmatprep.subr.mxu0 0.0
        %1502 = vmatpush1.xpose.msra.mxu0 0.0
        %1503 = vmatprep.subr.mxu0 0.0
        %1504 = vmatpush1.xpose.msra.mxu0 0.0
        %1505 = vmatprep.subr.mxu0 0.0
        %1506 = vmatpush1.xpose.msra.mxu0 0.0
        %1507 = vmatprep.mubr.f32.mxu0 0.0
        %1508 = vmatmul.mubr.f32.gmra.mrb[0].mxu0 %v1439
        %v1509 = vpop.f32.mrb[0].mxu0
        %v1510 = vadd.f32 0.0, %v1509
        %v1511 = vpop.f32.mrb[0].mxu0
        %1512 = vdwg.mxu0
        %v1513 = vmul.f32 %v1510, 0.25
        %v1514 = vsel %vm544, %v1513, -inf
        %1515 = vmax.xlane.f32.xlu0 %v1514
        %v1516 = vpop.xlane.xlu0 %1515
        %v1517 = vsub.f32 %v1513, %v1516
        %v1518 = vmul.f32 %v1517, 1.442695
        %v1519 = vpow.pop %v1518
        %v1520 = vsel %vm544, %v1519, 0.0
        %1521 = vadd.xlane.f32.xlu0 %v1520
        %v1522 = vpop.xlane.xlu0 %1521
        %v1523 = vrcp.pop %v1522
        %v1524 = vmul.f32 %v1519, %v1523
        %v1526 = vsel %vm544, %v1524, 0
        %1528 = vmatprep.subr.mxu0 0.0
        %1529 = vmatpush1.msra.mxu0 %v1433
        %1530 = vmatprep.subr.mxu0 0.0
        %1531 = vmatpush1.msra.mxu0 0.0
        %1532 = vmatprep.subr.mxu0 0.0
        %1533 = vmatpush1.msra.mxu0 0.0
        %1534 = vmatprep.subr.mxu0 0.0
        %1535 = vmatpush1.msra.mxu0 0.0
        %1536 = vmatprep.subr.mxu0 0.0
        %1537 = vmatpush1.msra.mxu0 0.0
        %1538 = vmatprep.subr.mxu0 0.0
        %1539 = vmatpush1.msra.mxu0 0.0
        %1540 = vmatprep.subr.mxu0 0.0
        %1541 = vmatpush1.msra.mxu0 0.0
        %1542 = vmatprep.subr.mxu0 0.0
        %1543 = vmatpush1.msra.mxu0 0.0
        %1544 = vmatprep.subr.mxu0 0.0
        %1545 = vmatpush1.msra.mxu0 0.0
        %1546 = vmatprep.subr.mxu0 0.0
        %1547 = vmatpush1.msra.mxu0 0.0
        %1548 = vmatprep.subr.mxu0 0.0
        %1549 = vmatpush1.msra.mxu0 0.0
        %1550 = vmatprep.subr.mxu0 0.0
        %1551 = vmatpush1.msra.mxu0 0.0
        %1552 = vmatprep.subr.mxu0 0.0
        %1553 = vmatpush1.msra.mxu0 0.0
        %1554 = vmatprep.subr.mxu0 0.0
        %1555 = vmatpush1.msra.mxu0 0.0
        %1556 = vmatprep.subr.mxu0 0.0
        %1557 = vmatpush1.msra.mxu0 0.0
        %1558 = vmatprep.subr.mxu0 0.0
        %1559 = vmatpush1.msra.mxu0 0.0
        %1560 = vmatprep.subr.mxu0 0.0
        %1561 = vmatpush1.msra.mxu0 0.0
        %1562 = vmatprep.subr.mxu0 0.0
        %1563 = vmatpush1.msra.mxu0 0.0
        %1564 = vmatprep.subr.mxu0 0.0
        %1565 = vmatpush1.msra.mxu0 0.0
        %1566 = vmatprep.subr.mxu0 0.0
        %1567 = vmatpush1.msra.mxu0 0.0
        %1568 = vmatprep.subr.mxu0 0.0
        %1569 = vmatpush1.msra.mxu0 0.0
        %1570 = vmatprep.subr.mxu0 0.0
        %1571 = vmatpush1.msra.mxu0 0.0
        %1572 = vmatprep.subr.mxu0 0.0
        %1573 = vmatpush1.msra.mxu0 0.0
        %1574 = vmatprep.subr.mxu0 0.0
        %1575 = vmatpush1.msra.mxu0 0.0
        %1576 = vmatprep.subr.mxu0 0.0
        %1577 = vmatpush1.msra.mxu0 0.0
        %1578 = vmatprep.subr.mxu0 0.0
        %1579 = vmatpush1.msra.mxu0 0.0
        %1580 = vmatprep.subr.mxu0 0.0
        %1581 = vmatpush1.msra.mxu0 0.0
        %1582 = vmatprep.subr.mxu0 0.0
        %1583 = vmatpush1.msra.mxu0 0.0
        %1584 = vmatprep.subr.mxu0 0.0
        %1585 = vmatpush1.msra.mxu0 0.0
        %1586 = vmatprep.subr.mxu0 0.0
        %1587 = vmatpush1.msra.mxu0 0.0
        %1588 = vmatprep.subr.mxu0 0.0
        %1589 = vmatpush1.msra.mxu0 0.0
        %1590 = vmatprep.subr.mxu0 0.0
        %1591 = vmatpush1.msra.mxu0 0.0
        %1592 = vmatprep.mubr.f32.mxu0 0.0
        %1593 = vmatmul.mubr.f32.gmra.mrb[0].mxu0 %v1526
        %v1594 = vpop.f32.mrb[0].mxu0
        %v1595 = vadd.f32 0.0, %v1594
        %v1596 = vpop.f32.mrb[0].mxu0
        %1597 = vdwg.mxu0
        %1598 = vrot.lane.b32.xlu0 %v1358, 112
        %v1599 = vpop.permute.xlu0 %1598
        %1600 = vrot.lane.b32.xlu0 %v1431, 48
        %v1601 = vpop.permute.xlu0 %1600
        %v1602 = vsel %vm468, %v1599, 0
        %v1604 = vsel %vm468, %v1601, 0
        %1606 = vmatprep.subr.mxu0 0.0
        %1607 = vmatpush1.xpose.msra.mxu0 %v1604
        %1608 = vmatprep.subr.mxu0 0.0
        %1609 = vmatpush1.xpose.msra.mxu0 0.0
        %1610 = vmatprep.subr.mxu0 0.0
        %1611 = vmatpush1.xpose.msra.mxu0 0.0
        %1612 = vmatprep.subr.mxu0 0.0
        %1613 = vmatpush1.xpose.msra.mxu0 0.0
        %1614 = vmatprep.subr.mxu0 0.0
        %1615 = vmatpush1.xpose.msra.mxu0 0.0
        %1616 = vmatprep.subr.mxu0 0.0
        %1617 = vmatpush1.xpose.msra.mxu0 0.0
        %1618 = vmatprep.subr.mxu0 0.0
        %1619 = vmatpush1.xpose.msra.mxu0 0.0
        %1620 = vmatprep.subr.mxu0 0.0
        %1621 = vmatpush1.xpose.msra.mxu0 0.0
        %1622 = vmatprep.subr.mxu0 0.0
        %1623 = vmatpush1.xpose.msra.mxu0 0.0
        %1624 = vmatprep.subr.mxu0 0.0
        %1625 = vmatpush1.xpose.msra.mxu0 0.0
        %1626 = vmatprep.subr.mxu0 0.0
        %1627 = vmatpush1.xpose.msra.mxu0 0.0
        %1628 = vmatprep.subr.mxu0 0.0
        %1629 = vmatpush1.xpose.msra.mxu0 0.0
        %1630 = vmatprep.subr.mxu0 0.0
        %1631 = vmatpush1.xpose.msra.mxu0 0.0
        %1632 = vmatprep.subr.mxu0 0.0
        %1633 = vmatpush1.xpose.msra.mxu0 0.0
        %1634 = vmatprep.subr.mxu0 0.0
        %1635 = vmatpush1.xpose.msra.mxu0 0.0
        %1636 = vmatprep.subr.mxu0 0.0
        %1637 = vmatpush1.xpose.msra.mxu0 0.0
        %1638 = vmatprep.subr.mxu0 0.0
        %1639 = vmatpush1.xpose.msra.mxu0 0.0
        %1640 = vmatprep.subr.mxu0 0.0
        %1641 = vmatpush1.xpose.msra.mxu0 0.0
        %1642 = vmatprep.subr.mxu0 0.0
        %1643 = vmatpush1.xpose.msra.mxu0 0.0
        %1644 = vmatprep.subr.mxu0 0.0
        %1645 = vmatpush1.xpose.msra.mxu0 0.0
        %1646 = vmatprep.subr.mxu0 0.0
        %1647 = vmatpush1.xpose.msra.mxu0 0.0
        %1648 = vmatprep.subr.mxu0 0.0
        %1649 = vmatpush1.xpose.msra.mxu0 0.0
        %1650 = vmatprep.subr.mxu0 0.0
        %1651 = vmatpush1.xpose.msra.mxu0 0.0
        %1652 = vmatprep.subr.mxu0 0.0
        %1653 = vmatpush1.xpose.msra.mxu0 0.0
        %1654 = vmatprep.subr.mxu0 0.0
        %1655 = vmatpush1.xpose.msra.mxu0 0.0
        %1656 = vmatprep.subr.mxu0 0.0
        %1657 = vmatpush1.xpose.msra.mxu0 0.0
        %1658 = vmatprep.subr.mxu0 0.0
        %1659 = vmatpush1.xpose.msra.mxu0 0.0
        %1660 = vmatprep.subr.mxu0 0.0
        %1661 = vmatpush1.xpose.msra.mxu0 0.0
        %1662 = vmatprep.subr.mxu0 0.0
        %1663 = vmatpush1.xpose.msra.mxu0 0.0
        %1664 = vmatprep.subr.mxu0 0.0
        %1665 = vmatpush1.xpose.msra.mxu0 0.0
        %1666 = vmatprep.subr.mxu0 0.0
        %1667 = vmatpush1.xpose.msra.mxu0 0.0
        %1668 = vmatprep.subr.mxu0 0.0
        %1669 = vmatpush1.xpose.msra.mxu0 0.0
        %1670 = vmatprep.mubr.f32.mxu0 0.0
        %1671 = vmatmul.mubr.f32.gmra.mrb[0].mxu0 %v1602
        %v1672 = vpop.f32.mrb[0].mxu0
        %v1673 = vadd.f32 0.0, %v1672
        %v1674 = vpop.f32.mrb[0].mxu0
        %1675 = vdwg.mxu0
        %v1676 = vmul.f32 %v1673, 0.25
        %v1677 = vsel %vm544, %v1676, -inf
        %1678 = vmax.xlane.f32.xlu0 %v1677
        %v1679 = vpop.xlane.xlu0 %1678
        %v1680 = vsub.f32 %v1676, %v1679
        %v1681 = vmul.f32 %v1680, 1.442695
        %v1682 = vpow.pop %v1681
        %v1683 = vsel %vm544, %v1682, 0.0
        %1684 = vadd.xlane.f32.xlu0 %v1683
        %v1685 = vpop.xlane.xlu0 %1684
        %v1686 = vrcp.pop %v1685
        %v1687 = vmul.f32 %v1682, %v1686
        %1689 = vrot.lane.b32.xlu0 %v1433, 112
        %v1690 = vpop.permute.xlu0 %1689
        %v1693 = vsel %vm544, %v1687, 0
        %1695 = vmatprep.subr.mxu0 0.0
        %1696 = vmatpush1.msra.mxu0 %v1690
        %1697 = vmatprep.subr.mxu0 0.0
        %1698 = vmatpush1.msra.mxu0 0.0
        %1699 = vmatprep.subr.mxu0 0.0
        %1700 = vmatpush1.msra.mxu0 0.0
        %1701 = vmatprep.subr.mxu0 0.0
        %1702 = vmatpush1.msra.mxu0 0.0
        %1703 = vmatprep.subr.mxu0 0.0
        %1704 = vmatpush1.msra.mxu0 0.0
        %1705 = vmatprep.subr.mxu0 0.0
        %1706 = vmatpush1.msra.mxu0 0.0
        %1707 = vmatprep.subr.mxu0 0.0
        %1708 = vmatpush1.msra.mxu0 0.0
        %1709 = vmatprep.subr.mxu0 0.0
        %1710 = vmatpush1.msra.mxu0 0.0
        %1711 = vmatprep.subr.mxu0 0.0
        %1712 = vmatpush1.msra.mxu0 0.0
        %1713 = vmatprep.subr.mxu0 0.0
        %1714 = vmatpush1.msra.mxu0 0.0
        %1715 = vmatprep.subr.mxu0 0.0
        %1716 = vmatpush1.msra.mxu0 0.0
        %1717 = vmatprep.subr.mxu0 0.0
        %1718 = vmatpush1.msra.mxu0 0.0
        %1719 = vmatprep.subr.mxu0 0.0
        %1720 = vmatpush1.msra.mxu0 0.0
        %1721 = vmatprep.subr.mxu0 0.0
        %1722 = vmatpush1.msra.mxu0 0.0
        %1723 = vmatprep.subr.mxu0 0.0
        %1724 = vmatpush1.msra.mxu0 0.0
        %1725 = vmatprep.subr.mxu0 0.0
        %1726 = vmatpush1.msra.mxu0 0.0
        %1727 = vmatprep.subr.mxu0 0.0
        %1728 = vmatpush1.msra.mxu0 0.0
        %1729 = vmatprep.subr.mxu0 0.0
        %1730 = vmatpush1.msra.mxu0 0.0
        %1731 = vmatprep.subr.mxu0 0.0
        %1732 = vmatpush1.msra.mxu0 0.0
        %1733 = vmatprep.subr.mxu0 0.0
        %1734 = vmatpush1.msra.mxu0 0.0
        %1735 = vmatprep.subr.mxu0 0.0
        %1736 = vmatpush1.msra.mxu0 0.0
        %1737 = vmatprep.subr.mxu0 0.0
        %1738 = vmatpush1.msra.mxu0 0.0
        %1739 = vmatprep.subr.mxu0 0.0
        %1740 = vmatpush1.msra.mxu0 0.0
        %1741 = vmatprep.subr.mxu0 0.0
        %1742 = vmatpush1.msra.mxu0 0.0
        %1743 = vmatprep.subr.mxu0 0.0
        %1744 = vmatpush1.msra.mxu0 0.0
        %1745 = vmatprep.subr.mxu0 0.0
        %1746 = vmatpush1.msra.mxu0 0.0
        %1747 = vmatprep.subr.mxu0 0.0
        %1748 = vmatpush1.msra.mxu0 0.0
        %1749 = vmatprep.subr.mxu0 0.0
        %1750 = vmatpush1.msra.mxu0 0.0
        %1751 = vmatprep.subr.mxu0 0.0
        %1752 = vmatpush1.msra.mxu0 0.0
        %1753 = vmatprep.subr.mxu0 0.0
        %1754 = vmatpush1.msra.mxu0 0.0
        %1755 = vmatprep.subr.mxu0 0.0
        %1756 = vmatpush1.msra.mxu0 0.0
        %1757 = vmatprep.subr.mxu0 0.0
        %1758 = vmatpush1.msra.mxu0 0.0
        %1759 = vmatprep.mubr.f32.mxu0 0.0
        %1760 = vmatmul.mubr.f32.gmra.mrb[0].mxu0 %v1693
        %v1761 = vpop.f32.mrb[0].mxu0
        %v1762 = vadd.f32 0.0, %v1761
        %v1763 = vpop.f32.mrb[0].mxu0
        %1764 = vdwg.mxu0
        %1765 = vrot.lane.b32.xlu0 %v1358, 96
        %v1766 = vpop.permute.xlu0 %1765
        %1767 = vrot.lane.b32.xlu0 %v1431, 32
        %v1768 = vpop.permute.xlu0 %1767
        %v1769 = vsel %vm468, %v1766, 0
        %v1771 = vsel %vm468, %v1768, 0
        %1773 = vmatprep.subr.mxu0 0.0
        %1774 = vmatpush1.xpose.msra.mxu0 %v1771
        %1775 = vmatprep.subr.mxu0 0.0
        %1776 = vmatpush1.xpose.msra.mxu0 0.0
        %1777 = vmatprep.subr.mxu0 0.0
        %1778 = vmatpush1.xpose.msra.mxu0 0.0
        %1779 = vmatprep.subr.mxu0 0.0
        %1780 = vmatpush1.xpose.msra.mxu0 0.0
        %1781 = vmatprep.subr.mxu0 0.0
        %1782 = vmatpush1.xpose.msra.mxu0 0.0
        %1783 = vmatprep.subr.mxu0 0.0
        %1784 = vmatpush1.xpose.msra.mxu0 0.0
        %1785 = vmatprep.subr.mxu0 0.0
        %1786 = vmatpush1.xpose.msra.mxu0 0.0
        %1787 = vmatprep.subr.mxu0 0.0
        %1788 = vmatpush1.xpose.msra.mxu0 0.0
        %1789 = vmatprep.subr.mxu0 0.0
        %1790 = vmatpush1.xpose.msra.mxu0 0.0
        %1791 = vmatprep.subr.mxu0 0.0
        %1792 = vmatpush1.xpose.msra.mxu0 0.0
        %1793 = vmatprep.subr.mxu0 0.0
        %1794 = vmatpush1.xpose.msra.mxu0 0.0
        %1795 = vmatprep.subr.mxu0 0.0
        %1796 = vmatpush1.xpose.msra.mxu0 0.0
        %1797 = vmatprep.subr.mxu0 0.0
        %1798 = vmatpush1.xpose.msra.mxu0 0.0
        %1799 = vmatprep.subr.mxu0 0.0
        %1800 = vmatpush1.xpose.msra.mxu0 0.0
        %1801 = vmatprep.subr.mxu0 0.0
        %1802 = vmatpush1.xpose.msra.mxu0 0.0
        %1803 = vmatprep.subr.mxu0 0.0
        %1804 = vmatpush1.xpose.msra.mxu0 0.0
        %1805 = vmatprep.subr.mxu0 0.0
        %1806 = vmatpush1.xpose.msra.mxu0 0.0
        %1807 = vmatprep.subr.mxu0 0.0
        %1808 = vmatpush1.xpose.msra.mxu0 0.0
        %1809 = vmatprep.subr.mxu0 0.0
        %1810 = vmatpush1.xpose.msra.mxu0 0.0
        %1811 = vmatprep.subr.mxu0 0.0
        %1812 = vmatpush1.xpose.msra.mxu0 0.0
        %1813 = vmatprep.subr.mxu0 0.0
        %1814 = vmatpush1.xpose.msra.mxu0 0.0
        %1815 = vmatprep.subr.mxu0 0.0
        %1816 = vmatpush1.xpose.msra.mxu0 0.0
        %1817 = vmatprep.subr.mxu0 0.0
        %1818 = vmatpush1.xpose.msra.mxu0 0.0
        %1819 = vmatprep.subr.mxu0 0.0
        %1820 = vmatpush1.xpose.msra.mxu0 0.0
        %1821 = vmatprep.subr.mxu0 0.0
        %1822 = vmatpush1.xpose.msra.mxu0 0.0
        %1823 = vmatprep.subr.mxu0 0.0
        %1824 = vmatpush1.xpose.msra.mxu0 0.0
        %1825 = vmatprep.subr.mxu0 0.0
        %1826 = vmatpush1.xpose.msra.mxu0 0.0
        %1827 = vmatprep.subr.mxu0 0.0
        %1828 = vmatpush1.xpose.msra.mxu0 0.0
        %1829 = vmatprep.subr.mxu0 0.0
        %1830 = vmatpush1.xpose.msra.mxu0 0.0
        %1831 = vmatprep.subr.mxu0 0.0
        %1832 = vmatpush1.xpose.msra.mxu0 0.0
        %1833 = vmatprep.subr.mxu0 0.0
        %1834 = vmatpush1.xpose.msra.mxu0 0.0
        %1835 = vmatprep.subr.mxu0 0.0
        %1836 = vmatpush1.xpose.msra.mxu0 0.0
        %1837 = vmatprep.mubr.f32.mxu0 0.0
        %1838 = vmatmul.mubr.f32.gmra.mrb[0].mxu0 %v1769
        %v1839 = vpop.f32.mrb[0].mxu0
        %v1840 = vadd.f32 0.0, %v1839
        %v1841 = vpop.f32.mrb[0].mxu0
        %1842 = vdwg.mxu0
        %v1843 = vmul.f32 %v1840, 0.25
        %v1844 = vsel %vm544, %v1843, -inf
        %1845 = vmax.xlane.f32.xlu0 %v1844
        %v1846 = vpop.xlane.xlu0 %1845
        %v1847 = vsub.f32 %v1843, %v1846
        %v1848 = vmul.f32 %v1847, 1.442695
        %v1849 = vpow.pop %v1848
        %v1850 = vsel %vm544, %v1849, 0.0
        %1851 = vadd.xlane.f32.xlu0 %v1850
        %v1852 = vpop.xlane.xlu0 %1851
        %v1853 = vrcp.pop %v1852
        %v1854 = vmul.f32 %v1849, %v1853
        %1855 = vrot.lane.b32.xlu0 %v1433, 96
        %v1856 = vpop.permute.xlu0 %1855
        %v1859 = vsel %vm544, %v1854, 0
        %1861 = vmatprep.subr.mxu0 0.0
        %1862 = vmatpush1.msra.mxu0 %v1856
        %1863 = vmatprep.subr.mxu0 0.0
        %1864 = vmatpush1.msra.mxu0 0.0
        %1865 = vmatprep.subr.mxu0 0.0
        %1866 = vmatpush1.msra.mxu0 0.0
        %1867 = vmatprep.subr.mxu0 0.0
        %1868 = vmatpush1.msra.mxu0 0.0
        %1869 = vmatprep.subr.mxu0 0.0
        %1870 = vmatpush1.msra.mxu0 0.0
        %1871 = vmatprep.subr.mxu0 0.0
        %1872 = vmatpush1.msra.mxu0 0.0
        %1873 = vmatprep.subr.mxu0 0.0
        %1874 = vmatpush1.msra.mxu0 0.0
        %1875 = vmatprep.subr.mxu0 0.0
        %1876 = vmatpush1.msra.mxu0 0.0
        %1877 = vmatprep.subr.mxu0 0.0
        %1878 = vmatpush1.msra.mxu0 0.0
        %1879 = vmatprep.subr.mxu0 0.0
        %1880 = vmatpush1.msra.mxu0 0.0
        %1881 = vmatprep.subr.mxu0 0.0
        %1882 = vmatpush1.msra.mxu0 0.0
        %1883 = vmatprep.subr.mxu0 0.0
        %1884 = vmatpush1.msra.mxu0 0.0
        %1885 = vmatprep.subr.mxu0 0.0
        %1886 = vmatpush1.msra.mxu0 0.0
        %1887 = vmatprep.subr.mxu0 0.0
        %1888 = vmatpush1.msra.mxu0 0.0
        %1889 = vmatprep.subr.mxu0 0.0
        %1890 = vmatpush1.msra.mxu0 0.0
        %1891 = vmatprep.subr.mxu0 0.0
        %1892 = vmatpush1.msra.mxu0 0.0
        %1893 = vmatprep.subr.mxu0 0.0
        %1894 = vmatpush1.msra.mxu0 0.0
        %1895 = vmatprep.subr.mxu0 0.0
        %1896 = vmatpush1.msra.mxu0 0.0
        %1897 = vmatprep.subr.mxu0 0.0
        %1898 = vmatpush1.msra.mxu0 0.0
        %1899 = vmatprep.subr.mxu0 0.0
        %1900 = vmatpush1.msra.mxu0 0.0
        %1901 = vmatprep.subr.mxu0 0.0
        %1902 = vmatpush1.msra.mxu0 0.0
        %1903 = vmatprep.subr.mxu0 0.0
        %1904 = vmatpush1.msra.mxu0 0.0
        %1905 = vmatprep.subr.mxu0 0.0
        %1906 = vmatpush1.msra.mxu0 0.0
        %1907 = vmatprep.subr.mxu0 0.0
        %1908 = vmatpush1.msra.mxu0 0.0
        %1909 = vmatprep.subr.mxu0 0.0
        %1910 = vmatpush1.msra.mxu0 0.0
        %1911 = vmatprep.subr.mxu0 0.0
        %1912 = vmatpush1.msra.mxu0 0.0
        %1913 = vmatprep.subr.mxu0 0.0
        %1914 = vmatpush1.msra.mxu0 0.0
        %1915 = vmatprep.subr.mxu0 0.0
        %1916 = vmatpush1.msra.mxu0 0.0
        %1917 = vmatprep.subr.mxu0 0.0
        %1918 = vmatpush1.msra.mxu0 0.0
        %1919 = vmatprep.subr.mxu0 0.0
        %1920 = vmatpush1.msra.mxu0 0.0
        %1921 = vmatprep.subr.mxu0 0.0
        %1922 = vmatpush1.msra.mxu0 0.0
        %1923 = vmatprep.subr.mxu0 0.0
        %1924 = vmatpush1.msra.mxu0 0.0
        %1925 = vmatprep.mubr.f32.mxu0 0.0
        %1926 = vmatmul.mubr.f32.gmra.mrb[0].mxu0 %v1859
        %v1927 = vpop.f32.mrb[0].mxu0
        %v1928 = vadd.f32 0.0, %v1927
        %v1929 = vpop.f32.mrb[0].mxu0
        %1930 = vdwg.mxu0
        %1931 = vrot.lane.b32.xlu0 %v1358, 80
        %v1932 = vpop.permute.xlu0 %1931
        %1933 = vrot.lane.b32.xlu0 %v1431, 16
        %v1934 = vpop.permute.xlu0 %1933
        %v1935 = vsel %vm468, %v1932, 0
        %v1937 = vsel %vm468, %v1934, 0
        %1939 = vmatprep.subr.mxu0 0.0
        %1940 = vmatpush1.xpose.msra.mxu0 %v1937
        %1941 = vmatprep.subr.mxu0 0.0
        %1942 = vmatpush1.xpose.msra.mxu0 0.0
        %1943 = vmatprep.subr.mxu0 0.0
        %1944 = vmatpush1.xpose.msra.mxu0 0.0
        %1945 = vmatprep.subr.mxu0 0.0
        %1946 = vmatpush1.xpose.msra.mxu0 0.0
        %1947 = vmatprep.subr.mxu0 0.0
        %1948 = vmatpush1.xpose.msra.mxu0 0.0
        %1949 = vmatprep.subr.mxu0 0.0
        %1950 = vmatpush1.xpose.msra.mxu0 0.0
        %1951 = vmatprep.subr.mxu0 0.0
        %1952 = vmatpush1.xpose.msra.mxu0 0.0
        %1953 = vmatprep.subr.mxu0 0.0
        %1954 = vmatpush1.xpose.msra.mxu0 0.0
        %1955 = vmatprep.subr.mxu0 0.0
        %1956 = vmatpush1.xpose.msra.mxu0 0.0
        %1957 = vmatprep.subr.mxu0 0.0
        %1958 = vmatpush1.xpose.msra.mxu0 0.0
        %1959 = vmatprep.subr.mxu0 0.0
        %1960 = vmatpush1.xpose.msra.mxu0 0.0
        %1961 = vmatprep.subr.mxu0 0.0
        %1962 = vmatpush1.xpose.msra.mxu0 0.0
        %1963 = vmatprep.subr.mxu0 0.0
        %1964 = vmatpush1.xpose.msra.mxu0 0.0
        %1965 = vmatprep.subr.mxu0 0.0
        %1966 = vmatpush1.xpose.msra.mxu0 0.0
        %1967 = vmatprep.subr.mxu0 0.0
        %1968 = vmatpush1.xpose.msra.mxu0 0.0
        %1969 = vmatprep.subr.mxu0 0.0
        %1970 = vmatpush1.xpose.msra.mxu0 0.0
        %1971 = vmatprep.subr.mxu0 0.0
        %1972 = vmatpush1.xpose.msra.mxu0 0.0
        %1973 = vmatprep.subr.mxu0 0.0
        %1974 = vmatpush1.xpose.msra.mxu0 0.0
        %1975 = vmatprep.subr.mxu0 0.0
        %1976 = vmatpush1.xpose.msra.mxu0 0.0
        %1977 = vmatprep.subr.mxu0 0.0
        %1978 = vmatpush1.xpose.msra.mxu0 0.0
        %1979 = vmatprep.subr.mxu0 0.0
        %1980 = vmatpush1.xpose.msra.mxu0 0.0
        %1981 = vmatprep.subr.mxu0 0.0
        %1982 = vmatpush1.xpose.msra.mxu0 0.0
        %1983 = vmatprep.subr.mxu0 0.0
        %1984 = vmatpush1.xpose.msra.mxu0 0.0
        %1985 = vmatprep.subr.mxu0 0.0
        %1986 = vmatpush1.xpose.msra.mxu0 0.0
        %1987 = vmatprep.subr.mxu0 0.0
        %1988 = vmatpush1.xpose.msra.mxu0 0.0
        %1989 = vmatprep.subr.mxu0 0.0
        %1990 = vmatpush1.xpose.msra.mxu0 0.0
        %1991 = vmatprep.subr.mxu0 0.0
        %1992 = vmatpush1.xpose.msra.mxu0 0.0
        %1993 = vmatprep.subr.mxu0 0.0
        %1994 = vmatpush1.xpose.msra.mxu0 0.0
        %1995 = vmatprep.subr.mxu0 0.0
        %1996 = vmatpush1.xpose.msra.mxu0 0.0
        %1997 = vmatprep.subr.mxu0 0.0
        %1998 = vmatpush1.xpose.msra.mxu0 0.0
        %1999 = vmatprep.subr.mxu0 0.0
        %2000 = vmatpush1.xpose.msra.mxu0 0.0
        %2001 = vmatprep.subr.mxu0 0.0
        %2002 = vmatpush1.xpose.msra.mxu0 0.0
        %2003 = vmatprep.mubr.f32.mxu0 0.0
        %2004 = vmatmul.mubr.f32.gmra.mrb[0].mxu0 %v1935
        %v2005 = vpop.f32.mrb[0].mxu0
        %v2006 = vadd.f32 0.0, %v2005
        %v2007 = vpop.f32.mrb[0].mxu0
        %2008 = vdwg.mxu0
        %v2009 = vmul.f32 %v2006, 0.25
        %v2010 = vsel %vm544, %v2009, -inf
        %2011 = vmax.xlane.f32.xlu0 %v2010
        %v2012 = vpop.xlane.xlu0 %2011
        %v2013 = vsub.f32 %v2009, %v2012
        %v2014 = vmul.f32 %v2013, 1.442695
        %v2015 = vpow.pop %v2014
        %v2016 = vsel %vm544, %v2015, 0.0
        %2017 = vadd.xlane.f32.xlu0 %v2016
        %v2018 = vpop.xlane.xlu0 %2017
        %v2019 = vrcp.pop %v2018
        %v2020 = vmul.f32 %v2015, %v2019
        %2021 = vrot.lane.b32.xlu0 %v1433, 80
        %v2022 = vpop.permute.xlu0 %2021
        %v2025 = vsel %vm544, %v2020, 0
        %2027 = vmatprep.subr.mxu0 0.0
        %2028 = vmatpush1.msra.mxu0 %v2022
        %2029 = vmatprep.subr.mxu0 0.0
        %2030 = vmatpush1.msra.mxu0 0.0
        %2031 = vmatprep.subr.mxu0 0.0
        %2032 = vmatpush1.msra.mxu0 0.0
        %2033 = vmatprep.subr.mxu0 0.0
        %2034 = vmatpush1.msra.mxu0 0.0
        %2035 = vmatprep.subr.mxu0 0.0
        %2036 = vmatpush1.msra.mxu0 0.0
        %2037 = vmatprep.subr.mxu0 0.0
        %2038 = vmatpush1.msra.mxu0 0.0
        %2039 = vmatprep.subr.mxu0 0.0
        %2040 = vmatpush1.msra.mxu0 0.0
        %2041 = vmatprep.subr.mxu0 0.0
        %2042 = vmatpush1.msra.mxu0 0.0
        %2043 = vmatprep.subr.mxu0 0.0
        %2044 = vmatpush1.msra.mxu0 0.0
        %2045 = vmatprep.subr.mxu0 0.0
        %2046 = vmatpush1.msra.mxu0 0.0
        %2047 = vmatprep.subr.mxu0 0.0
        %2048 = vmatpush1.msra.mxu0 0.0
        %2049 = vmatprep.subr.mxu0 0.0
        %2050 = vmatpush1.msra.mxu0 0.0
        %2051 = vmatprep.subr.mxu0 0.0
        %2052 = vmatpush1.msra.mxu0 0.0
        %2053 = vmatprep.subr.mxu0 0.0
        %2054 = vmatpush1.msra.mxu0 0.0
        %2055 = vmatprep.subr.mxu0 0.0
        %2056 = vmatpush1.msra.mxu0 0.0
        %2057 = vmatprep.subr.mxu0 0.0
        %2058 = vmatpush1.msra.mxu0 0.0
        %2059 = vmatprep.subr.mxu0 0.0
        %2060 = vmatpush1.msra.mxu0 0.0
        %2061 = vmatprep.subr.mxu0 0.0
        %2062 = vmatpush1.msra.mxu0 0.0
        %2063 = vmatprep.subr.mxu0 0.0
        %2064 = vmatpush1.msra.mxu0 0.0
        %2065 = vmatprep.subr.mxu0 0.0
        %2066 = vmatpush1.msra.mxu0 0.0
        %2067 = vmatprep.subr.mxu0 0.0
        %2068 = vmatpush1.msra.mxu0 0.0
        %2069 = vmatprep.subr.mxu0 0.0
        %2070 = vmatpush1.msra.mxu0 0.0
        %2071 = vmatprep.subr.mxu0 0.0
        %2072 = vmatpush1.msra.mxu0 0.0
        %2073 = vmatprep.subr.mxu0 0.0
        %2074 = vmatpush1.msra.mxu0 0.0
        %2075 = vmatprep.subr.mxu0 0.0
        %2076 = vmatpush1.msra.mxu0 0.0
        %2077 = vmatprep.subr.mxu0 0.0
        %2078 = vmatpush1.msra.mxu0 0.0
        %2079 = vmatprep.subr.mxu0 0.0
        %2080 = vmatpush1.msra.mxu0 0.0
        %2081 = vmatprep.subr.mxu0 0.0
        %2082 = vmatpush1.msra.mxu0 0.0
        %2083 = vmatprep.subr.mxu0 0.0
        %2084 = vmatpush1.msra.mxu0 0.0
        %2085 = vmatprep.subr.mxu0 0.0
        %2086 = vmatpush1.msra.mxu0 0.0
        %2087 = vmatprep.subr.mxu0 0.0
        %2088 = vmatpush1.msra.mxu0 0.0
        %2089 = vmatprep.subr.mxu0 0.0
        %2090 = vmatpush1.msra.mxu0 0.0
        %2091 = vmatprep.mubr.f32.mxu0 0.0
        %2092 = vmatmul.mubr.f32.gmra.mrb[0].mxu0 %v2025
        %v2093 = vpop.f32.mrb[0].mxu0
        %v2094 = vadd.f32 0.0, %v2093
        %v2095 = vpop.f32.mrb[0].mxu0
        %2096 = vdwg.mxu0
        %2098 = vrot.lane.b32.xlu0 %v1762, 16
        %v2099 = vpop.permute.xlu0 %2098
        %2102 = vrot.lane.b32.xlu0 %v1928, 32
        %v2103 = vpop.permute.xlu0 %2102
        %2106 = vrot.lane.b32.xlu0 %v2094, 48
        %v2107 = vpop.permute.xlu0 %2106
        %v2109 = vsel %vm468, %v1595, %v2099
        %v2110 = vsel %vm1141, %v2109, %v2103
        %v2111 = vsel %vm1143, %v2110, %v2107
        %s2112 = scalar_lea.vmem [#allocation8], 64
        %v2113 = vld [vmem:[%s2112] sm:$0xff]
        %v2114 = vld [vmem:[%s2112 + $0x8] sm:$0xff]
        %v2115 = vld [vmem:[%s2112 + $0x10] sm:$0xff]
        %v2116 = vld [vmem:[%s2112 + $0x18] sm:$0xff]
        %v2117 = vld [vmem:[%s2112 + $0x20] sm:$0xff]
        %v2118 = vld [vmem:[%s2112 + $0x28] sm:$0xff]
        %v2119 = vld [vmem:[%s2112 + $0x30] sm:$0xff]
        %v2120 = vld [vmem:[%s2112 + $0x38] sm:$0xff]
        %v2121 = vld [vmem:[%s5 + $0x1] sm:$0x1]
        %v2122 = vlaneseq
        %v2123 = vshrl.u32 %v2122, 7
        %v2124 = vsub.s32 0, %v2123
        %v2125 = vrot.slane %v2121, %v2124
        %v2127 = vsel %vm390, %v2111, 0
        %2129 = vmatprep.subr.mxu0 0.0
        %2130 = vmatpush1.msra.mxu0 %v2113
        %2131 = vmatprep.subr.mxu0 0.0
        %2132 = vmatpush1.msra.mxu0 %v2114
        %2133 = vmatprep.subr.mxu0 0.0
        %2134 = vmatpush1.msra.mxu0 %v2115
        %2135 = vmatprep.subr.mxu0 0.0
        %2136 = vmatpush1.msra.mxu0 %v2116
        %2137 = vmatprep.subr.mxu0 0.0
        %2138 = vmatpush1.msra.mxu0 %v2117
        %2139 = vmatprep.subr.mxu0 0.0
        %2140 = vmatpush1.msra.mxu0 %v2118
        %2141 = vmatprep.subr.mxu0 0.0
        %2142 = vmatpush1.msra.mxu0 %v2119
        %2143 = vmatprep.subr.mxu0 0.0
        %2144 = vmatpush1.msra.mxu0 %v2120
        %2145 = vmatprep.subr.mxu0 0.0
        %2146 = vmatpush1.msra.mxu0 0.0
        %2147 = vmatprep.subr.mxu0 0.0
        %2148 = vmatpush1.msra.mxu0 0.0
        %2149 = vmatprep.subr.mxu0 0.0
        %2150 = vmatpush1.msra.mxu0 0.0
        %2151 = vmatprep.subr.mxu0 0.0
        %2152 = vmatpush1.msra.mxu0 0.0
        %2153 = vmatprep.subr.mxu0 0.0
        %2154 = vmatpush1.msra.mxu0 0.0
        %2155 = vmatprep.subr.mxu0 0.0
        %2156 = vmatpush1.msra.mxu0 0.0
        %2157 = vmatprep.subr.mxu0 0.0
        %2158 = vmatpush1.msra.mxu0 0.0
        %2159 = vmatprep.subr.mxu0 0.0
        %2160 = vmatpush1.msra.mxu0 0.0
        %2161 = vmatprep.subr.mxu0 0.0
        %2162 = vmatpush1.msra.mxu0 0.0
        %2163 = vmatprep.subr.mxu0 0.0
        %2164 = vmatpush1.msra.mxu0 0.0
        %2165 = vmatprep.subr.mxu0 0.0
        %2166 = vmatpush1.msra.mxu0 0.0
        %2167 = vmatprep.subr.mxu0 0.0
        %2168 = vmatpush1.msra.mxu0 0.0
        %2169 = vmatprep.subr.mxu0 0.0
        %2170 = vmatpush1.msra.mxu0 0.0
        %2171 = vmatprep.subr.mxu0 0.0
        %2172 = vmatpush1.msra.mxu0 0.0
        %2173 = vmatprep.subr.mxu0 0.0
        %2174 = vmatpush1.msra.mxu0 0.0
        %2175 = vmatprep.subr.mxu0 0.0
        %2176 = vmatpush1.msra.mxu0 0.0
        %2177 = vmatprep.subr.mxu0 0.0
        %2178 = vmatpush1.msra.mxu0 0.0
        %2179 = vmatprep.subr.mxu0 0.0
        %2180 = vmatpush1.msra.mxu0 0.0
        %2181 = vmatprep.subr.mxu0 0.0
        %2182 = vmatpush1.msra.mxu0 0.0
        %2183 = vmatprep.subr.mxu0 0.0
        %2184 = vmatpush1.msra.mxu0 0.0
        %2185 = vmatprep.subr.mxu0 0.0
        %2186 = vmatpush1.msra.mxu0 0.0
        %2187 = vmatprep.subr.mxu0 0.0
        %2188 = vmatpush1.msra.mxu0 0.0
        %2189 = vmatprep.subr.mxu0 0.0
        %2190 = vmatpush1.msra.mxu0 0.0
        %2191 = vmatprep.subr.mxu0 0.0
        %2192 = vmatpush1.msra.mxu0 0.0
        %2193 = vmatprep.mubr.f32.mxu0 0.0
        %2194 = vmatmul.mubr.f32.gmra.mrb[0].mxu0 %v2127
        %v2195 = vpop.f32.mrb[0].mxu0
        %v2196 = vadd.f32 %v2125, %v2195
        %v2197 = vpop.f32.mrb[0].mxu0
        %2198 = vdwg.mxu0
        %v2199 = vadd.f32 %v2196, %v1257
        %v2200 = vld [vmem:[%s6 + $0x2] sm:$0x1]
        %v2201 = vld [vmem:[%s6 + $0x3] sm:$0x1]
        %v2202 = vsel %vm390, %v2199, 0.0
        %2203 = vadd.xlane.f32.xlu0 %v2202
        %v2204 = vpop.xlane.xlu0 %2203
        %v2205 = vmul.f32 %v2204, %v1237
        %v2206 = vsub.f32 %v2199, %v2205
        %v2207 = vmul.f32 %v2206, %v2206
        %v2208 = vsel %vm390, %v2207, 0.0
        %2209 = vadd.xlane.f32.xlu0 %v2208
        %v2210 = vpop.xlane.xlu0 %2209
        %v2211 = vmul.f32 %v2210, %v1237
        %v2212 = vadd.f32 %v2211, 1e-05
        %v2213 = vrsqrt.pop %v2212
        %v2214 = vmul.f32 %v2206, %v2213
        %v2215 = vlaneseq
        %v2216 = vshrl.u32 %v2215, 7
        %v2217 = vsub.s32 0, %v2216
        %v2218 = vrot.slane %v2200, %v2217
        %v2219 = vmul.f32 %v2214, %v2218
        %v2220 = vlaneseq
        %v2221 = vshrl.u32 %v2220, 7
        %v2222 = vsub.s32 0, %v2221
        %v2223 = vrot.slane %v2201, %v2222
        %v2224 = vadd.f32 %v2219, %v2223
        %v2225 = vadd.f32 %v2224, %v2224
        %v2226 = vld [vmem:[%s6 + $0x4] sm:$0x1]
        %v2227 = vld [vmem:[%s6 + $0x5] sm:$0x1]
        %v2228 = vsel %vm390, %v2225, 0.0
        %2229 = vadd.xlane.f32.xlu0 %v2228
        %v2230 = vpop.xlane.xlu0 %2229
        %v2231 = vmul.f32 %v2230, %v1237
        %v2232 = vsub.f32 %v2225, %v2231
        %v2233 = vmul.f32 %v2232, %v2232
        %v2234 = vsel %vm390, %v2233, 0.0
        %2235 = vadd.xlane.f32.xlu0 %v2234
        %v2236 = vpop.xlane.xlu0 %2235
        %v2237 = vmul.f32 %v2236, %v1237
        %v2238 = vadd.f32 %v2237, 1e-05
        %v2239 = vrsqrt.pop %v2238
        %v2240 = vmul.f32 %v2232, %v2239
        %v2241 = vlaneseq
        %v2242 = vshrl.u32 %v2241, 7
        %v2243 = vsub.s32 0, %v2242
        %v2244 = vrot.slane %v2226, %v2243
        %v2245 = vmul.f32 %v2240, %v2244
        %v2246 = vlaneseq
        %v2247 = vshrl.u32 %v2246, 7
        %v2248 = vsub.s32 0, %v2247
        %v2249 = vrot.slane %v2227, %v2248
        %v2250 = vadd.f32 %v2245, %v2249
        %2251 = vst.msk [vmem:[%s359] sm:$0xff] %vm390, %v2250
        %s2252 = sand.u32 %s193, 1
        %s2253 = scalar_lea.sflag [#allocation4], %s2252
        %s2254 = sand.u32 %s193, 1
        %s2255 = smul.addr %s2254, 8
        %s2256 = scalar_lea.vmem [#allocation10], %s2255
        // Predicated region
        $region65: #{decoder_block.1} parent=47 // pred_check
          %p2257 = pneg %p203
        $region66: #{decoder_block.1} parent=47 // pred_check_branch
          %2259 = sbr.rel (%p2257) target = $region68
        $region67: #{decoder_block.1} parent=47 // pred_region
          %s2261 = ssub.s32 128, 128
          %2262 = vsyncadd %s2253, %s2261
          %s2263 = smul.addr %s28, 128
          %s2264 = scalar_lea.hbm %s7, %s2263
          %s2266 = sshll.u32 %s2256, 4
          %s2267 = int_to_ptr.vmem [resolvable:$true] %s2266
          %2269 = dma.vmem_to_hbm [thread:$0]  %s2267, 128, %s2264, %s2253
        $region68: #{decoder_block.1} parent=47 // pred_fallthru
          _
      $region48: #{decoder_block.1} parent=5 // pred_fallthru
        _
      %p2270 = scmp.le.s32.totalorder 2, %s23
      // Predicated region
      $region69: #{decoder_block.1} parent=5 // pred_check
        %p2271 = pneg %p2270
      $region70: #{decoder_block.1} parent=5 // pred_check_branch
        %2273 = sbr.rel (%p2271) target = $region72
      $region71: #{decoder_block.1} parent=5 // pred_region
        %s2274 = ssub.s32 %s23, 2
        // Predicated region
        $region73: #{decoder_block.1} parent=71 // pred_check
          %p2275 = pneg %p209
        $region74: #{decoder_block.1} parent=71 // pred_check_branch
          %2277 = sbr.rel (%p2275) target = $region76
        $region75: #{decoder_block.1} parent=71 // pred_region
          %s2278 = sand.u32 %s194, 1
          %s2279 = scalar_lea.sflag [#allocation4], %s2278
          %s2280 = sand.u32 %s194, 1
          %s2281 = smul.addr %s2280, 8
          %s2282 = scalar_lea.vmem [#allocation10], %s2281
          %2283 = dma.done %s2279, 128
        $region76: #{decoder_block.1} parent=71 // pred_fallthru
          _
      $region72: #{decoder_block.1} parent=5 // pred_fallthru
        _
    $region6: #{decoder_block.1} parent=1 // loop_footer
      %s27 = sadd.s32 1, %s23
    $region7: #{decoder_block.1} parent=1 // loop_footer_branch
      %22 = sbr.rel target = $region3
    $region8: #{decoder_block.1} parent=1 // loop_exit
      _
    %2284 = vsyncpa [#allocation3], 1
    %s2285 = scalar_lea.sflag [#allocation3], 1
    %2286 = vsyncpa %s2285, 1
    %2287 = vsyncpa [#allocation6], 1
    %s2288 = scalar_lea.sflag [#allocation6], 1
    %2289 = vsyncpa %s2288, 1
    %2290 = vsyncpa [#allocation9], 1
    %2291 = vsyncpa [#allocation4], 1
    %s2292 = scalar_lea.sflag [#allocation4], 1
    %2293 = vsyncpa %s2292, 1

</llo_original>
